<compile_context>
chip_gen: v7x
topology: tpu7x:2x2x1
jax: 0.10.0
libtpu: 0.0.40
codegen_flags: <defaults>
</compile_context>

<pallas_src>
import functools

import jax
import jax.numpy as jnp
from jax import lax
from jax.experimental import pallas as pl
from jax.experimental.pallas import tpu as pltpu


def _round_up(x, m):
    return (x + m - 1) // m * m


def _vmem_budget_bytes():
    """Generation-aware VMEM budget: ~half of physical VMEM (64 MiB v5e/v6e, 32 MiB v7x)."""
    cap = None
    try:
        cap = getattr(pltpu.get_tpu_info(), "vmem_capacity_bytes", None)
    except Exception:
        cap = None
    if not cap:
        cap = 64 * 1024 * 1024  # v7x-safe fallback
    return max(32 * 1024 * 1024, int(cap) // 2)


def _choose_blocks(Lq, Lk, D, Dv_p, itemsizes, budget):
    """Pick (block_q, block_k) from a VMEM budget; full dims when they already fit."""
    q_it, k_it, v_it, adj_it, out_it = itemsizes

    def est(bq, bk):
        # double-buffered in/out blocks + scratch + live f32 score/prob tiles
        io = 2 * (bq * D * q_it + bk * D * k_it + bk * Dv_p * v_it
                  + bq * bk * adj_it + bq * Dv_p * out_it)
        scratch = bq * Dv_p * 4 + 2 * bq * 128 * 4
        temps = 3 * bq * bk * 4
        return io + scratch + temps

    bq = Lq if Lq <= 512 else 512      # >=256 rows per MXU call (256x256 MXU on v6e/v7x)
    bk = Lk if Lk <= 1024 else 1024
    while est(bq, bk) > budget:
        if bk > 128:
            bk = max(128, (bk // 2) // 128 * 128)
        elif bq > 256:
            bq = max(256, (bq // 2) // 8 * 8)
        else:
            break
    return bq, bk


def _make_attn_kernel(inv_temperature):
    def attn_kernel(q_ref, k_ref, v_ref, adj_ref, o_ref, m_sc, l_sc, acc_sc):
        # Blocks: q (1, bq, D), k (1, bk, D), v (1, bk, Dv_p), adj (1, bq, bk), out (1, bq, Dv_p).
        ki = pl.program_id(2)

        @pl.when(ki == 0)
        def _():
            m_sc[...] = jnp.full(m_sc.shape, -jnp.inf, dtype=m_sc.dtype)
            l_sc[...] = jnp.zeros(l_sc.shape, dtype=l_sc.dtype)
            acc_sc[...] = jnp.zeros(acc_sc.shape, dtype=acc_sc.dtype)

        q = q_ref[0]                                               # (bq, D), native dtype
        q = q * jnp.asarray(inv_temperature, dtype=q.dtype)        # fold 1/T: bq*D multiplies
        k = k_ref[0]                                               # (bk, D)
        v = v_ref[0]                                               # (bk, Dv_p)
        adj = adj_ref[0]                                           # (bq, bk), native dtype

        # scores = q @ k^T, contracting on D for both operands (no relayout), f32 accumulate.
        s = lax.dot_general(q, k, (((1,), (1,)), ((), ())),
                            preferred_element_type=jnp.float32)
        s = jnp.where(adj == 0, -jnp.inf, s)                       # masked_fill(adj == 0, -inf)

        # Online-softmax update: running max / denominator / un-normalized accumulator.
        m_prev = m_sc[...]
        m_new = jnp.maximum(m_prev, jnp.max(s, axis=-1, keepdims=True))
        # Guard rows fully masked so far (m_new == -inf): keep l/acc at 0 instead of NaN;
        # rows that stay fully masked still finalize to 0 * (1/0) = NaN (torch semantics).
        m_safe = jnp.where(m_new == -jnp.inf, 0.0, m_new)
        alpha = jnp.exp(m_prev - m_safe)                           # (bq, 1)
        p = jnp.exp(s - m_safe)                                    # (bq, bk) f32, un-normalized
        l_sc[...] = alpha * l_sc[...] + jnp.sum(p, axis=-1, keepdims=True)
        acc_sc[...] = alpha * acc_sc[...] + jnp.dot(
            p.astype(v.dtype), v, preferred_element_type=jnp.float32)
        m_sc[...] = m_new

        # TODO(synk): attn_dropout defaults to 0 in the module, so dropout is the identity here.
        @pl.when(ki == pl.num_programs(2) - 1)
        def _():
            # Deferred normalization: one bq*Dv multiply; approx reciprocal runs on the EUP.
            inv_l = pl.reciprocal(l_sc[...], approx=True)
            o_ref[0] = (acc_sc[...] * inv_l).astype(o_ref.dtype)

    return attn_kernel


@functools.partial(jax.jit, static_argnums=(4, 5, 6))
def scaled_dot_product_attention(q, k, v, adj, temperature, block_q=None, block_k=None):
    B, Lq, D = q.shape
    _, Lk, _ = k.shape
    _, _, Dv = v.shape
    assert k.shape == (B, Lk, D)
    assert v.shape == (B, Lk, Dv)
    assert adj.shape == (B, Lq, Lk)

    out_dtype = q.dtype

    # Lane-dense output/v stores: pad only the Dv lane dim to a multiple of 128.
    Dv_p = _round_up(Dv, 128) if Dv % 128 else Dv

    budget = _vmem_budget_bytes()
    itemsizes = tuple(jnp.dtype(x.dtype).itemsize for x in (q, k, v, adj)) + (
        jnp.dtype(out_dtype).itemsize,)
    bq, bk = _choose_blocks(Lq, Lk, D, Dv_p, itemsizes, budget)
    if block_q is not None:
        bq = int(block_q)
    if block_k is not None:
        bk = int(block_k)

    # Minimal padding: only the dims we actually tile. D is never padded (blocks span it).
    Lq_p = Lq if bq >= Lq else _round_up(Lq, bq)
    Lk_p = Lk if bk >= Lk else _round_up(Lk, bk)
    bq = min(bq, Lq_p)
    bk = min(bk, Lk_p)

    def pad3(x, d1, d2):
        if x.shape[1] == d1 and x.shape[2] == d2:
            return x
        return jnp.pad(x, ((0, 0), (0, d1 - x.shape[1]), (0, d2 - x.shape[2])))

    q_p = pad3(q, Lq_p, D)
    k_p = pad3(k, Lk_p, D)
    v_p = pad3(v, Lk_p, Dv_p)
    adj_p = pad3(adj, Lq_p, Lk_p)    # zero padding == masked-out keys / dead query rows

    grid = (B, Lq_p // bq, Lk_p // bk)

    cost = pl.CostEstimate(
        flops=int(2 * B * Lq_p * Lk_p * (D + Dv_p)),
        transcendentals=int(B * Lq_p * Lk_p),
        bytes_accessed=int(q_p.size * q_p.dtype.itemsize
                           + k_p.size * k_p.dtype.itemsize
                           + v_p.size * v_p.dtype.itemsize
                           + adj_p.size * adj_p.dtype.itemsize
                           + B * Lq_p * Dv_p * jnp.dtype(out_dtype).itemsize),
    )

    # TODO(synk): if the adj/k/v DMA is still exposed after KV tiling, add
    # pipeline_mode=pl.Buffered(3) on those BlockSpecs (re-check the VMEM budget on v7x).
    out_p = pl.pallas_call(
        _make_attn_kernel(1.0 / float(temperature)),
        out_shape=jax.ShapeDtypeStruct((B, Lq_p, Dv_p), out_dtype),
        grid_spec=pltpu.PrefetchScalarGridSpec(
            num_scalar_prefetch=0,
            grid=grid,
            in_specs=[
                pl.BlockSpec((1, bq, D), lambda b, qi, ki: (b, qi, 0)),
                pl.BlockSpec((1, bk, D), lambda b, qi, ki: (b, ki, 0)),
                pl.BlockSpec((1, bk, Dv_p), lambda b, qi, ki: (b, ki, 0)),
                pl.BlockSpec((1, bq, bk), lambda b, qi, ki: (b, qi, ki)),
            ],
            out_specs=pl.BlockSpec((1, bq, Dv_p), lambda b, qi, ki: (b, qi, 0)),
            scratch_shapes=[
                pltpu.VMEM((bq, 1), jnp.float32),     # running max
                pltpu.VMEM((bq, 1), jnp.float32),     # running denominator
                pltpu.VMEM((bq, Dv_p), jnp.float32),  # un-normalized accumulator
            ],
        ),
        compiler_params=pltpu.CompilerParams(
            dimension_semantics=("parallel", "parallel", "arbitrary"),
            vmem_limit_bytes=int(budget),
        ),
        cost_estimate=cost,
    )(q_p, k_p, v_p, adj_p)

    if Lq_p != Lq or Dv_p != Dv:
        out_p = out_p[:, :Lq, :Dv]
    return out_p


def _reference(q, k, v, adj, temperature):
    qf, kf, vf = (x.astype(jnp.float32) for x in (q, k, v))
    s = jnp.einsum("bqd,bkd->bqk", qf, kf) / temperature
    s = jnp.where(adj == 0, -jnp.inf, s)
    attn = jax.nn.softmax(s, axis=-1)
    return jnp.einsum("bqk,bkd->bqd", attn, vf)


def _make_inputs(key, B, Lq, Lk, D, Dv, dtype):
    kq, kk, kv, ka = jax.random.split(key, 4)
    q = jax.random.normal(kq, (B, Lq, D), dtype=jnp.float32).astype(dtype)
    k = jax.random.normal(kk, (B, Lk, D), dtype=jnp.float32).astype(dtype)
    v = jax.random.normal(kv, (B, Lk, Dv), dtype=jnp.float32).astype(dtype)
    adj = (jax.random.uniform(ka, (B, Lq, Lk)) > 0.5).astype(jnp.float32)
    # Ensure no row is fully masked (avoids the intentional NaN path, matching torch otherwise).
    adj = adj.at[:, :, 0].set(1.0)
    return q, k, v, adj


if __name__ == "__main__":
    key = jax.random.PRNGKey(0)
    k1, k2, k3 = jax.random.split(key, 3)

    # Case 1: bf16, MXU/lane-aligned shapes (fast path, no padding, single KV block).
    B, Lq, Lk, D, Dv = 4, 128, 128, 128, 128
    temperature = float(D) ** 0.5
    q, k, v, adj = _make_inputs(k1, B, Lq, Lk, D, Dv, jnp.bfloat16)
    out = jax.block_until_ready(scaled_dot_product_attention(q, k, v, adj, temperature))
    ref = _reference(q, k, v, adj, temperature)
    assert out.shape == (B, Lq, Dv)
    assert out.dtype == q.dtype
    assert jnp.allclose(out.astype(jnp.float32), ref, atol=5e-2, rtol=5e-2), "bf16 mismatch"

    # Case 2: f32, small unaligned shapes (full-dim blocks, only Dv lane padding).
    B, Lq, Lk, D, Dv = 2, 8, 12, 32, 40
    temperature = float(D) ** 0.5
    q, k, v, adj = _make_inputs(k2, B, Lq, Lk, D, Dv, jnp.float32)
    out = jax.block_until_ready(scaled_dot_product_attention(q, k, v, adj, temperature))
    ref = _reference(q, k, v, adj, temperature)
    assert out.shape == (B, Lq, Dv)
    assert jnp.allclose(out, ref, atol=5e-2, rtol=5e-2), "f32 mismatch"

    # Case 3: f32, forced KV tiling (block_k=128 over Lk=256) exercises the online softmax.
    B, Lq, Lk, D, Dv = 2, 16, 256, 32, 32
    temperature = float(D) ** 0.5
    q, k, v, adj = _make_inputs(k3, B, Lq, Lk, D, Dv, jnp.float32)
    out = jax.block_until_ready(
        scaled_dot_product_attention(q, k, v, adj, temperature, None, 128))
    ref = _reference(q, k, v, adj, temperature)
    assert out.shape == (B, Lq, Dv)
    assert jnp.allclose(out, ref, atol=5e-2, rtol=5e-2), "online-softmax mismatch"

    print("KERNEL_OK")
</pallas_src>

<mosaic_0001>
module attributes {stable_mosaic.version = 11 : i64} {
  func.func @attn_kernel(%arg0: i32, %arg1: i32, %arg2: i32, %arg3: memref<1x128x128xbf16, #tpu.memory_space<vmem>>, %arg4: memref<1x128x128xbf16, #tpu.memory_space<vmem>>, %arg5: memref<1x128x128xbf16, #tpu.memory_space<vmem>>, %arg6: memref<1x128x128xf32, #tpu.memory_space<vmem>>, %arg7: memref<1x128x128xbf16, #tpu.memory_space<vmem>>, %arg8: memref<128x1xf32, #tpu.memory_space<vmem>>, %arg9: memref<128x1xf32, #tpu.memory_space<vmem>>, %arg10: memref<128x128xf32, #tpu.memory_space<vmem>>) attributes {dimension_semantics = [#tpu.dimension_semantics<parallel>, #tpu.dimension_semantics<parallel>, #tpu.dimension_semantics<arbitrary>], iteration_bounds = array<i64: 4, 1, 1>, scalar_prefetch = 0 : i64, scratch_operands = 3 : i64, tpu.core_type = #tpu.core_type<tc>, window_params = [{transform_indices = @transform_0, window_bounds = array<i64: 1, 128, 128>}, {transform_indices = @transform_1, window_bounds = array<i64: 1, 128, 128>}, {transform_indices = @transform_2, window_bounds = array<i64: 1, 128, 128>}, {transform_indices = @transform_3, window_bounds = array<i64: 1, 128, 128>}, {transform_indices = @transform_4, window_bounds = array<i64: 1, 128, 128>}]} {
    %c0_i32 = arith.constant 0 : i32
    %0 = arith.cmpi eq, %arg2, %c0_i32 : i32
    %1 = arith.extui %0 : i1 to i32
    %c0_i32_0 = arith.constant 0 : i32
    %2 = arith.cmpi ne, %1, %c0_i32_0 : i32
    scf.if %2 {
      %cst_34 = arith.constant 0xFF800000 : f32
      %48 = vector.broadcast %cst_34 : f32 to vector<128x1xf32>
      %c0_35 = arith.constant 0 : index
      %c0_36 = arith.constant 0 : index
      %49 = vector.load %arg8[%c0_35, %c0_36] : memref<128x1xf32, #tpu.memory_space<vmem>>, vector<128x1xf32>
      tpu.vector_store %arg8[%c0_35, %c0_36], %48 {strides = array<i32>} : memref<128x1xf32, #tpu.memory_space<vmem>>, vector<128x1xf32>,
      %cst_37 = arith.constant 0.000000e+00 : f32
      %50 = vector.broadcast %cst_37 : f32 to vector<128x1xf32>
      %c0_38 = arith.constant 0 : index
      %c0_39 = arith.constant 0 : index
      %51 = vector.load %arg9[%c0_38, %c0_39] : memref<128x1xf32, #tpu.memory_space<vmem>>, vector<128x1xf32>
      tpu.vector_store %arg9[%c0_38, %c0_39], %50 {strides = array<i32>} : memref<128x1xf32, #tpu.memory_space<vmem>>, vector<128x1xf32>,
      %cst_40 = arith.constant 0.000000e+00 : f32
      %52 = vector.broadcast %cst_40 : f32 to vector<128x128xf32>
      %c0_41 = arith.constant 0 : index
      %c0_42 = arith.constant 0 : index
      %53 = vector.load %arg10[%c0_41, %c0_42] : memref<128x128xf32, #tpu.memory_space<vmem>>, vector<128x128xf32>
      tpu.vector_store %arg10[%c0_41, %c0_42], %52 {strides = array<i32>} : memref<128x128xf32, #tpu.memory_space<vmem>>, vector<128x128xf32>,
    } else {
    }
    %c0 = arith.constant 0 : index
    %c0_1 = arith.constant 0 : index
    %c0_2 = arith.constant 0 : index
    %3 = vector.load %arg3[%c0, %c0_1, %c0_2] : memref<1x128x128xbf16, #tpu.memory_space<vmem>>, vector<1x128x128xbf16>
    %4 = vector.shape_cast %3 : vector<1x128x128xbf16> to vector<128x128xbf16>
    %cst = arith.constant 8.837890e-02 : bf16
    %5 = vector.broadcast %cst : bf16 to vector<128x128xbf16>
    %6 = arith.mulf %4, %5 : vector<128x128xbf16>
    %c0_3 = arith.constant 0 : index
    %c0_4 = arith.constant 0 : index
    %c0_5 = arith.constant 0 : index
    %7 = vector.load %arg4[%c0_3, %c0_4, %c0_5] : memref<1x128x128xbf16, #tpu.memory_space<vmem>>, vector<1x128x128xbf16>
    %8 = vector.shape_cast %7 : vector<1x128x128xbf16> to vector<128x128xbf16>
    %c0_6 = arith.constant 0 : index
    %c0_7 = arith.constant 0 : index
    %c0_8 = arith.constant 0 : index
    %9 = vector.load %arg5[%c0_6, %c0_7, %c0_8] : memref<1x128x128xbf16, #tpu.memory_space<vmem>>, vector<1x128x128xbf16>
    %10 = vector.shape_cast %9 : vector<1x128x128xbf16> to vector<128x128xbf16>
    %c0_9 = arith.constant 0 : index
    %c0_10 = arith.constant 0 : index
    %c0_11 = arith.constant 0 : index
    %11 = vector.load %arg6[%c0_9, %c0_10, %c0_11] : memref<1x128x128xf32, #tpu.memory_space<vmem>>, vector<1x128x128xf32>
    %12 = vector.shape_cast %11 : vector<1x128x128xf32> to vector<128x128xf32>
    %cst_12 = arith.constant dense<0.000000e+00> : vector<128x128xf32>
    %13 = tpu.matmul %6, %8, %cst_12 {dimension_numbers = #tpu.dot_dimension_numbers<[1], [1], [0], [0], [0, 0, 1, 0], [], []>} : vector<128x128xbf16>, vector<128x128xbf16>, vector<128x128xf32> -> vector<128x128xf32>
    %cst_13 = arith.constant 0.000000e+00 : f32
    %14 = vector.broadcast %cst_13 : f32 to vector<128x128xf32>
    %15 = arith.cmpf oeq, %12, %14 : vector<128x128xf32>
    %cst_14 = arith.constant 0xFF800000 : f32
    %16 = vector.broadcast %cst_14 : f32 to vector<128x128xf32>
    %17 = arith.select %15, %16, %13 : vector<128x128xi1>, vector<128x128xf32>
    %c0_15 = arith.constant 0 : index
    %c0_16 = arith.constant 0 : index
    %18 = vector.load %arg8[%c0_15, %c0_16] : memref<128x1xf32, #tpu.memory_space<vmem>>, vector<128x1xf32>
    %cst_17 = arith.constant dense<0xFF800000> : vector<128xf32>
    %19 = vector.multi_reduction <maximumf>, %17, %cst_17 [1] : vector<128x128xf32> to vector<128xf32>
    %20 = vector.shape_cast %19 : vector<128xf32> to vector<128x1xf32>
    %21 = arith.maximumf %18, %20 : vector<128x1xf32>
    %cst_18 = arith.constant 0xFF800000 : f32
    %22 = vector.broadcast %cst_18 : f32 to vector<128x1xf32>
    %23 = arith.cmpf oeq, %21, %22 : vector<128x1xf32>
    %cst_19 = arith.constant 0.000000e+00 : f32
    %24 = vector.broadcast %cst_19 : f32 to vector<128x1xf32>
    %25 = arith.select %23, %24, %21 : vector<128x1xi1>, vector<128x1xf32>
    %26 = arith.subf %18, %25 : vector<128x1xf32>
    %27 = math.exp %26 : vector<128x1xf32>
    %28 = vector.broadcast %25 : vector<128x1xf32> to vector<128x128xf32>
    %29 = arith.subf %17, %28 : vector<128x128xf32>
    %30 = math.exp %29 : vector<128x128xf32>
    %c0_20 = arith.constant 0 : index
    %c0_21 = arith.constant 0 : index
    %31 = vector.load %arg9[%c0_20, %c0_21] : memref<128x1xf32, #tpu.memory_space<vmem>>, vector<128x1xf32>
    %32 = arith.mulf %27, %31 : vector<128x1xf32>
    %cst_22 = arith.constant dense<0.000000e+00> : vector<128xf32>
    %33 = vector.multi_reduction <add>, %30, %cst_22 [1] : vector<128x128xf32> to vector<128xf32>
    %34 = vector.shape_cast %33 : vector<128xf32> to vector<128x1xf32>
    %35 = arith.addf %32, %34 : vector<128x1xf32>
    %c0_23 = arith.constant 0 : index
    %c0_24 = arith.constant 0 : index
    %36 = vector.load %arg9[%c0_23, %c0_24] : memref<128x1xf32, #tpu.memory_space<vmem>>, vector<128x1xf32>
    tpu.vector_store %arg9[%c0_23, %c0_24], %35 {strides = array<i32>} : memref<128x1xf32, #tpu.memory_space<vmem>>, vector<128x1xf32>,
    %c0_25 = arith.constant 0 : index
    %c0_26 = arith.constant 0 : index
    %37 = vector.load %arg10[%c0_25, %c0_26] : memref<128x128xf32, #tpu.memory_space<vmem>>, vector<128x128xf32>
    %38 = vector.broadcast %27 : vector<128x1xf32> to vector<128x128xf32>
    %39 = arith.mulf %38, %37 : vector<128x128xf32>
    %40 = arith.truncf %30 : vector<128x128xf32> to vector<128x128xbf16>
    %cst_27 = arith.constant dense<0.000000e+00> : vector<128x128xf32>
    %41 = tpu.matmul %40, %10, %cst_27 {dimension_numbers = #tpu.dot_dimension_numbers<[1], [0], [0], [1], [0, 0, 1, 1], [], []>} : vector<128x128xbf16>, vector<128x128xbf16>, vector<128x128xf32> -> vector<128x128xf32>
    %42 = arith.addf %39, %41 : vector<128x128xf32>
    %c0_28 = arith.constant 0 : index
    %c0_29 = arith.constant 0 : index
    %43 = vector.load %arg10[%c0_28, %c0_29] : memref<128x128xf32, #tpu.memory_space<vmem>>, vector<128x128xf32>
    tpu.vector_store %arg10[%c0_28, %c0_29], %42 {strides = array<i32>} : memref<128x128xf32, #tpu.memory_space<vmem>>, vector<128x128xf32>,
    %c0_30 = arith.constant 0 : index
    %c0_31 = arith.constant 0 : index
    %44 = vector.load %arg8[%c0_30, %c0_31] : memref<128x1xf32, #tpu.memory_space<vmem>>, vector<128x1xf32>
    tpu.vector_store %arg8[%c0_30, %c0_31], %21 {strides = array<i32>} : memref<128x1xf32, #tpu.memory_space<vmem>>, vector<128x1xf32>,
    %c0_i32_32 = arith.constant 0 : i32
    %45 = arith.cmpi eq, %arg2, %c0_i32_32 : i32
    %46 = arith.extui %45 : i1 to i32
    %c0_i32_33 = arith.constant 0 : i32
    %47 = arith.cmpi ne, %46, %c0_i32_33 : i32
    scf.if %47 {
      %c0_34 = arith.constant 0 : index
      %c0_35 = arith.constant 0 : index
      %48 = vector.load %arg9[%c0_34, %c0_35] : memref<128x1xf32, #tpu.memory_space<vmem>>, vector<128x1xf32>
      %49 = tpu.reciprocal %48 {approx = true} : vector<128x1xf32> -> vector<128x1xf32>
      %c0_36 = arith.constant 0 : index
      %c0_37 = arith.constant 0 : index
      %50 = vector.load %arg10[%c0_36, %c0_37] : memref<128x128xf32, #tpu.memory_space<vmem>>, vector<128x128xf32>
      %51 = vector.broadcast %49 : vector<128x1xf32> to vector<128x128xf32>
      %52 = arith.mulf %50, %51 : vector<128x128xf32>
      %53 = arith.truncf %52 : vector<128x128xf32> to vector<128x128xbf16>
      %c0_38 = arith.constant 0 : index
      %c0_39 = arith.constant 0 : index
      %c0_40 = arith.constant 0 : index
      %54 = vector.load %arg7[%c0_38, %c0_39, %c0_40] : memref<1x128x128xbf16, #tpu.memory_space<vmem>>, vector<1x128x128xbf16>
      %55 = vector.shape_cast %54 : vector<1x128x128xbf16> to vector<128x128xbf16>
      %56 = vector.shape_cast %53 : vector<128x128xbf16> to vector<1x128x128xbf16>
      tpu.vector_store %arg7[%c0_38, %c0_39, %c0_40], %56 {strides = array<i32>} : memref<1x128x128xbf16, #tpu.memory_space<vmem>>, vector<1x128x128xbf16>,
    } else {
    }
    return
  }
  func.func @transform_0(%arg0: i32, %arg1: i32, %arg2: i32) -> (i32, i32, i32) {
    %c0_i32 = arith.constant 0 : i32
    %c0_i32_0 = arith.constant 0 : i32
    return %arg0, %arg1, %c0_i32 : i32, i32, i32
  }
  func.func @transform_1(%arg0: i32, %arg1: i32, %arg2: i32) -> (i32, i32, i32) {
    %c0_i32 = arith.constant 0 : i32
    %c0_i32_0 = arith.constant 0 : i32
    return %arg0, %arg2, %c0_i32 : i32, i32, i32
  }
  func.func @transform_2(%arg0: i32, %arg1: i32, %arg2: i32) -> (i32, i32, i32) {
    %c0_i32 = arith.constant 0 : i32
    %c0_i32_0 = arith.constant 0 : i32
    return %arg0, %arg2, %c0_i32 : i32, i32, i32
  }
  func.func @transform_3(%arg0: i32, %arg1: i32, %arg2: i32) -> (i32, i32, i32) {
    %c0_i32 = arith.constant 0 : i32
    return %arg0, %arg1, %arg2 : i32, i32, i32
  }
  func.func @transform_4(%arg0: i32, %arg1: i32, %arg2: i32) -> (i32, i32, i32) {
    %c0_i32 = arith.constant 0 : i32
    %c0_i32_0 = arith.constant 0 : i32
    return %arg0, %arg1, %c0_i32 : i32, i32, i32
  }
}

</mosaic_0001>

<llo_original>
// kernel: scaled_dot_product_attention.1
$region0: #{scaled_dot_product_attention.1}
  #allocation0 [shape = 'u32[]', space=smem, size = 0x4, offset = 0x4, fixed_abs, tag = 'smem constant byte address 0x4 - core index']
  #allocation1 [shape = 'u32[144,128]{1,0:T(1,128)}', space=vmem, size = 0x12000, scoped, tag = 'internal scratch']
  #allocation2 [shape = 'f32[128,1]{1,0:T(8,128)}', space=vmem, size = 0x10000, scoped, tag = 'scratch operand']
  #allocation3 [shape = 'f32[128,1]{1,0:T(8,128)}', space=vmem, size = 0x10000, scoped, tag = 'scratch operand']
  #allocation4 [shape = 'f32[128,128]{1,0:T(8,128)}', space=vmem, size = 0x10000, scoped, tag = 'scratch operand']
  %s0 = inlined_call_operand.hbm [shape: bf16[4,128,128], index: 0, kind: input, shape index: {}]
  %s1 = inlined_call_operand.hbm [shape: bf16[4,128,128], index: 1, kind: input, shape index: {}]
  %s2 = inlined_call_operand.hbm [shape: bf16[4,128,128], index: 2, kind: input, shape index: {}]
  %s3 = inlined_call_operand.hbm [shape: f32[4,128,128], index: 3, kind: input, shape index: {}]
  %s4 = inlined_call_operand.hbm [shape: bf16[4,128,128], index: 4, kind: output, shape index: {}]
  %s5 = sld [smem:[#allocation0]]
  $region73: #{scaled_dot_product_attention.1} parent=0
    _
  %s7 = ssub.s32 1, %s5
  %s8 = scalar_select 0, %s7, %s5
  $region1: #{scaled_dot_product_attention.1} parent=0
    #allocation5 [shape = 'u8[65536]{0}', space=vmem, size = 0x10000, scoped, tag = 'input window, operand 0']
    #allocation6 [shape = 's32[2]{0}', space=sflag, size = 0x8, scoped, tag = 'scoped memory for scaled_dot_product_attention.1']
    #allocation7 [shape = 's32[2]{0}', space=sflag, size = 0x8, scoped, tag = 'scoped memory for scaled_dot_product_attention.1']
    #allocation8 [shape = 'u8[65536]{0}', space=vmem, size = 0x10000, scoped, tag = 'input window, operand 1']
    #allocation9 [shape = 's32[2]{0}', space=sflag, size = 0x8, scoped, tag = 'scoped memory for scaled_dot_product_attention.1']
    #allocation10 [shape = 'u8[65536]{0}', space=vmem, size = 0x10000, scoped, tag = 'input window, operand 2']
    #allocation11 [shape = 'u8[131072]{0}', space=vmem, size = 0x20000, scoped, tag = 'input window, operand 3']
    #allocation12 [shape = 's32[2]{0}', space=sflag, size = 0x8, scoped, tag = 'scoped memory for scaled_dot_product_attention.1']
    #allocation13 [shape = 'u8[65536]{0}', space=vmem, size = 0x10000, scoped, tag = 'output window, operand 0']
    %9 = vsyncpa [#allocation6], 0
    %s10 = scalar_lea.sflag [#allocation6], 1
    %11 = vsyncpa %s10, 0
    %12 = vsyncpa [#allocation9], 0
    %s13 = scalar_lea.sflag [#allocation9], 1
    %14 = vsyncpa %s13, 0
    %15 = vsyncpa [#allocation12], 0
    %s16 = scalar_lea.sflag [#allocation12], 1
    %17 = vsyncpa %s16, 0
    %18 = vsyncpa [#allocation7], 0
    %s19 = scalar_lea.sflag [#allocation7], 1
    %20 = vsyncpa %s19, 0
    loop: start=0, step=1, limit=6
    $region2: #{scaled_dot_product_attention.1} parent=1 // loop_pre_header
      _
    $region3: #{scaled_dot_product_attention.1} parent=1 // loop_header
      %s22 = sphi 0, %s26
      %p23 = scmp.ge.s32.totalorder %s22, 6
      %s29 = sphi 0, %s48
      %s30 = sphi 0, %s44
      %s31 = sphi 0, %s40
      %s32 = sphi 0, %s29
      %s33 = sphi 0, %s30
      %s34 = sphi 0, %s31
      %s35 = sphi 0, %s32
      %s36 = sphi 0, %s33
      %s37 = sphi 0, %s34
      %s53 = sphi 0, %s55
      %s56 = sphi 0, %s53
      %s57 = sphi 0, %s56
      %s73 = sphi 0, %s57
      %s81 = sphi 0, %s83
      %s84 = sphi 0, %s81
      %s85 = sphi 0, %s84
      %s101 = sphi 0, %s85
      %s109 = sphi 0, %s111
      %s112 = sphi 0, %s109
      %s113 = sphi 0, %s112
      %s129 = sphi 0, %s113
      %s139 = sphi 0, %s141
      %s142 = sphi 0, %s139
      %s143 = sphi 0, %s142
      %s159 = sphi 0, %s143
      %s167 = sphi 0, %s169
      %s170 = sphi 0, %s167
      %s171 = sphi 0, %s170
      %s187 = sphi 0, %s171
    $region4: #{scaled_dot_product_attention.1} parent=1 // loop_header_branch
      %25 = sbr.rel (%p23) target = $region8
    $region5: #{scaled_dot_product_attention.1} parent=1 // loop_body
      %s27 = ssub.s32 %s22, 1
      %s28 = ssub.s32 %s22, 2
      %s38 = sadd.s32 1, %s31
      %p39 = scmp.ge.s32.totalorder %s38, 1
      %s40 = scalar_select %p39, 0, %s38
      %s41 = sadd.s32 1, %s30
      %s42 = scalar_select %p39, %s41, %s30
      %p43 = scmp.ge.s32.totalorder %s42, 1
      %s44 = scalar_select %p43, 0, %s42
      %s45 = sadd.s32 1, %s29
      %s46 = scalar_select %p43, %s45, %s29
      %p47 = scmp.ge.s32.totalorder %s46, 4
      %s48 = scalar_select %p47, 0, %s46
      %s49 = ssub.s32 %s29, %s48
      %s50 = ssub.s32 %s30, %s44
      %s51 = sor.u32 %s49, %s50
      %p52 = scmp.eq.s32.totalorder %s51, 0
      %s54 = sadd.s32 %s53, 1
      %s55 = scalar_select %p52, %s53, %s54
      %p58 = pneg %p52
      %p59 = scmp.eq.s32.totalorder %s22, 3
      %p60 = por %p58, %p59
      %p61 = scmp.ne.s32.totalorder %s53, %s56
      %p62 = scmp.eq.s32.totalorder %s22, 0
      %p63 = por %p61, %p62
      %p64 = scmp.ne.s32.totalorder %s53, %s56
      %p65 = scmp.eq.s32.totalorder %s27, 3
      %p66 = por %p64, %p65
      %p67 = scmp.ne.s32.totalorder %s56, %s57
      %p68 = scmp.eq.s32.totalorder %s27, 0
      %p69 = por %p67, %p68
      %p70 = scmp.ne.s32.totalorder %s56, %s57
      %p71 = scmp.eq.s32.totalorder %s28, 3
      %p72 = por %p70, %p71
      %p74 = scmp.ne.s32.totalorder %s57, %s73
      %p75 = scmp.eq.s32.totalorder %s28, 0
      %p76 = por %p74, %p75
      %s77 = ssub.s32 %s29, %s48
      %s78 = ssub.s32 %s31, %s40
      %s79 = sor.u32 %s77, %s78
      %p80 = scmp.eq.s32.totalorder %s79, 0
      %s82 = sadd.s32 %s81, 1
      %s83 = scalar_select %p80, %s81, %s82
      %p86 = pneg %p80
      %p87 = scmp.eq.s32.totalorder %s22, 3
      %p88 = por %p86, %p87
      %p89 = scmp.ne.s32.totalorder %s81, %s84
      %p90 = scmp.eq.s32.totalorder %s22, 0
      %p91 = por %p89, %p90
      %p92 = scmp.ne.s32.totalorder %s81, %s84
      %p93 = scmp.eq.s32.totalorder %s27, 3
      %p94 = por %p92, %p93
      %p95 = scmp.ne.s32.totalorder %s84, %s85
      %p96 = scmp.eq.s32.totalorder %s27, 0
      %p97 = por %p95, %p96
      %p98 = scmp.ne.s32.totalorder %s84, %s85
      %p99 = scmp.eq.s32.totalorder %s28, 3
      %p100 = por %p98, %p99
      %p102 = scmp.ne.s32.totalorder %s85, %s101
      %p103 = scmp.eq.s32.totalorder %s28, 0
      %p104 = por %p102, %p103
      %s105 = ssub.s32 %s29, %s48
      %s106 = ssub.s32 %s31, %s40
      %s107 = sor.u32 %s105, %s106
      %p108 = scmp.eq.s32.totalorder %s107, 0
      %s110 = sadd.s32 %s109, 1
      %s111 = scalar_select %p108, %s109, %s110
      %p114 = pneg %p108
      %p115 = scmp.eq.s32.totalorder %s22, 3
      %p116 = por %p114, %p115
      %p117 = scmp.ne.s32.totalorder %s109, %s112
      %p118 = scmp.eq.s32.totalorder %s22, 0
      %p119 = por %p117, %p118
      %p120 = scmp.ne.s32.totalorder %s109, %s112
      %p121 = scmp.eq.s32.totalorder %s27, 3
      %p122 = por %p120, %p121
      %p123 = scmp.ne.s32.totalorder %s112, %s113
      %p124 = scmp.eq.s32.totalorder %s27, 0
      %p125 = por %p123, %p124
      %p126 = scmp.ne.s32.totalorder %s112, %s113
      %p127 = scmp.eq.s32.totalorder %s28, 3
      %p128 = por %p126, %p127
      %p130 = scmp.ne.s32.totalorder %s113, %s129
      %p131 = scmp.eq.s32.totalorder %s28, 0
      %p132 = por %p130, %p131
      %s133 = ssub.s32 %s29, %s48
      %s134 = ssub.s32 %s30, %s44
      %s135 = sor.u32 %s133, %s134
      %s136 = ssub.s32 %s31, %s40
      %s137 = sor.u32 %s135, %s136
      %p138 = scmp.eq.s32.totalorder %s137, 0
      %s140 = sadd.s32 %s139, 1
      %s141 = scalar_select %p138, %s139, %s140
      %p144 = pneg %p138
      %p145 = scmp.eq.s32.totalorder %s22, 3
      %p146 = por %p144, %p145
      %p147 = scmp.ne.s32.totalorder %s139, %s142
      %p148 = scmp.eq.s32.totalorder %s22, 0
      %p149 = por %p147, %p148
      %p150 = scmp.ne.s32.totalorder %s139, %s142
      %p151 = scmp.eq.s32.totalorder %s27, 3
      %p152 = por %p150, %p151
      %p153 = scmp.ne.s32.totalorder %s142, %s143
      %p154 = scmp.eq.s32.totalorder %s27, 0
      %p155 = por %p153, %p154
      %p156 = scmp.ne.s32.totalorder %s142, %s143
      %p157 = scmp.eq.s32.totalorder %s28, 3
      %p158 = por %p156, %p157
      %p160 = scmp.ne.s32.totalorder %s143, %s159
      %p161 = scmp.eq.s32.totalorder %s28, 0
      %p162 = por %p160, %p161
      %s163 = ssub.s32 %s29, %s48
      %s164 = ssub.s32 %s30, %s44
      %s165 = sor.u32 %s163, %s164
      %p166 = scmp.eq.s32.totalorder %s165, 0
      %s168 = sadd.s32 %s167, 1
      %s169 = scalar_select %p166, %s167, %s168
      %p172 = pneg %p166
      %p173 = scmp.eq.s32.totalorder %s22, 3
      %p174 = por %p172, %p173
      %p175 = scmp.ne.s32.totalorder %s167, %s170
      %p176 = scmp.eq.s32.totalorder %s22, 0
      %p177 = por %p175, %p176
      %p178 = scmp.ne.s32.totalorder %s167, %s170
      %p179 = scmp.eq.s32.totalorder %s27, 3
      %p180 = por %p178, %p179
      %p181 = scmp.ne.s32.totalorder %s170, %s171
      %p182 = scmp.eq.s32.totalorder %s27, 0
      %p183 = por %p181, %p182
      %p184 = scmp.ne.s32.totalorder %s170, %s171
      %p185 = scmp.eq.s32.totalorder %s28, 3
      %p186 = por %p184, %p185
      %p188 = scmp.ne.s32.totalorder %s171, %s187
      %p189 = scmp.eq.s32.totalorder %s28, 0
      %p190 = por %p188, %p189
      %p191 = scmp.le.s32.totalorder 1, %s22
      %p192 = scmp.lt.s32.totalorder %s22, 5
      %p193 = pnand %p191, %p192
      %p194 = pneg %p193
      // Predicated region
      $region9: #{scaled_dot_product_attention.1} parent=5 // pred_check
        _
      $region10: #{scaled_dot_product_attention.1} parent=5 // pred_check_branch
        %196 = sbr.rel (%p193) target = $region12
      $region11: #{scaled_dot_product_attention.1} parent=5 // pred_region
        %s197 = ssub.s32 %s22, 1
      $region12: #{scaled_dot_product_attention.1} parent=5 // pred_fallthru
        _
      %p198 = scmp.lt.s32.totalorder %s22, 4
      // Predicated region
      $region13: #{scaled_dot_product_attention.1} parent=5 // pred_check
        %p199 = pneg %p198
      $region14: #{scaled_dot_product_attention.1} parent=5 // pred_check_branch
        %201 = sbr.rel (%p199) target = $region16
      $region15: #{scaled_dot_product_attention.1} parent=5 // pred_region
        // Predicated region
        $region17: #{scaled_dot_product_attention.1} parent=15 // pred_check
          %p202 = pneg %p63
        $region18: #{scaled_dot_product_attention.1} parent=15 // pred_check_branch
          %204 = sbr.rel (%p202) target = $region20
        $region19: #{scaled_dot_product_attention.1} parent=15 // pred_region
          %s205 = sand.u32 %s53, 1
          %s206 = scalar_lea.sflag [#allocation6], %s205
          %s207 = sand.u32 %s53, 1
          %s208 = smul.addr %s207, 64
          %s209 = scalar_lea.vmem [#allocation5], %s208
          %s210 = smul.u32 16, %s30
          %s212 = ssub.s32 1024, 1024
          %213 = vsyncadd %s206, %s212
          %s214 = smul.addr %s29, 16
          %s215 = sadd.s32 %s210, %s214
          %s216 = smul.addr %s215, 64
          %s217 = scalar_lea.hbm %s0, %s216
          %s218 = sshll.u32 %s209, 4
          %s219 = int_to_ptr.vmem [resolvable:$true] %s218
          %224 = dma.hbm_to_vmem [thread:$0]  %s217, 1024, %s219, %s206, 64, 64, 4
        $region20: #{scaled_dot_product_attention.1} parent=15 // pred_fallthru
          _
        // Predicated region
        $region21: #{scaled_dot_product_attention.1} parent=15 // pred_check
          %p225 = pneg %p91
        $region22: #{scaled_dot_product_attention.1} parent=15 // pred_check_branch
          %227 = sbr.rel (%p225) target = $region24
        $region23: #{scaled_dot_product_attention.1} parent=15 // pred_region
          %s228 = sand.u32 %s22, 1
          %s229 = scalar_lea.sflag [#allocation9], %s228
          %s230 = sand.u32 %s81, 1
          %s231 = smul.addr %s230, 64
          %s232 = scalar_lea.vmem [#allocation8], %s231
          %s233 = smul.u32 16, %s31
          %s235 = ssub.s32 1024, 1024
          %236 = vsyncadd %s229, %s235
          %s237 = smul.addr %s29, 16
          %s238 = sadd.s32 %s233, %s237
          %s239 = smul.addr %s238, 64
          %s240 = scalar_lea.hbm %s1, %s239
          %s241 = sshll.u32 %s232, 4
          %s242 = int_to_ptr.vmem [resolvable:$true] %s241
          %247 = dma.hbm_to_vmem [thread:$0]  %s240, 1024, %s242, %s229, 64, 64, 4
        $region24: #{scaled_dot_product_attention.1} parent=15 // pred_fallthru
          _
        // Predicated region
        $region25: #{scaled_dot_product_attention.1} parent=15 // pred_check
          %p248 = pneg %p119
        $region26: #{scaled_dot_product_attention.1} parent=15 // pred_check_branch
          %250 = sbr.rel (%p248) target = $region28
        $region27: #{scaled_dot_product_attention.1} parent=15 // pred_region
          %s251 = sand.u32 %s22, 1
          %s252 = scalar_lea.sflag [#allocation9], %s251
          %s253 = sand.u32 %s109, 1
          %s254 = smul.addr %s253, 64
          %s255 = scalar_lea.vmem [#allocation10], %s254
          %s256 = smul.u32 16, %s31
          %s258 = ssub.s32 1024, 1024
          %259 = vsyncadd %s252, %s258
          %s260 = smul.addr %s29, 16
          %s261 = sadd.s32 %s256, %s260
          %s262 = smul.addr %s261, 64
          %s263 = scalar_lea.hbm %s2, %s262
          %s264 = sshll.u32 %s255, 4
          %s265 = int_to_ptr.vmem [resolvable:$true] %s264
          %270 = dma.hbm_to_vmem [thread:$0]  %s263, 1024, %s265, %s252, 64, 64, 4
        $region28: #{scaled_dot_product_attention.1} parent=15 // pred_fallthru
          _
        // Predicated region
        $region29: #{scaled_dot_product_attention.1} parent=15 // pred_check
          %p271 = pneg %p149
        $region30: #{scaled_dot_product_attention.1} parent=15 // pred_check_branch
          %273 = sbr.rel (%p271) target = $region32
        $region31: #{scaled_dot_product_attention.1} parent=15 // pred_region
          %s274 = sand.u32 %s139, 1
          %s275 = scalar_lea.sflag [#allocation12], %s274
          %s276 = sand.u32 %s139, 1
          %s277 = smul.addr %s276, 128
          %s278 = scalar_lea.vmem [#allocation11], %s277
          %s279 = smul.u32 16, %s30
          %s281 = ssub.s32 2048, 2048
          %282 = vsyncadd %s275, %s281
          %s283 = sadd.s32 %s31, %s279
          %s284 = smul.addr %s29, 16
          %s285 = sadd.s32 %s283, %s284
          %s286 = smul.addr %s285, 128
          %s287 = scalar_lea.hbm %s3, %s286
          %s288 = sshll.u32 %s278, 4
          %s289 = int_to_ptr.vmem [resolvable:$true] %s288
          %294 = dma.hbm_to_vmem [thread:$0]  %s287, 2048, %s289, %s275, 128, 128, 8
        $region32: #{scaled_dot_product_attention.1} parent=15 // pred_fallthru
          _
      $region16: #{scaled_dot_product_attention.1} parent=5 // pred_fallthru
        _
      %p295 = scmp.le.s32.totalorder 1, %s22
      %p296 = scmp.lt.s32.totalorder %s22, 5
      %p297 = pnand %p295, %p296
      %p298 = pneg %p297
      // Predicated region
      $region33: #{scaled_dot_product_attention.1} parent=5 // pred_check
        _
      $region34: #{scaled_dot_product_attention.1} parent=5 // pred_check_branch
        %300 = sbr.rel (%p297) target = $region36
      $region35: #{scaled_dot_product_attention.1} parent=5 // pred_region
        %s301 = ssub.s32 %s22, 1
        %s302 = sand.u32 %s56, 1
        %s303 = scalar_lea.sflag [#allocation6], %s302
        %s304 = sand.u32 %s56, 1
        %s305 = smul.addr %s304, 64
        %s306 = scalar_lea.vmem [#allocation5], %s305
        // Predicated region
        $region37: #{scaled_dot_product_attention.1} parent=35 // pred_check
          %p307 = pneg %p69
        $region38: #{scaled_dot_product_attention.1} parent=35 // pred_check_branch
          %309 = sbr.rel (%p307) target = $region40
        $region39: #{scaled_dot_product_attention.1} parent=35 // pred_region
          %310 = dma.done %s303, 1024
        $region40: #{scaled_dot_product_attention.1} parent=35 // pred_fallthru
          _
        %s311 = sand.u32 %s27, 1
        %s312 = scalar_lea.sflag [#allocation9], %s311
        %s313 = sand.u32 %s84, 1
        %s314 = smul.addr %s313, 64
        %s315 = scalar_lea.vmem [#allocation8], %s314
        // Predicated region
        $region41: #{scaled_dot_product_attention.1} parent=35 // pred_check
          %p316 = pneg %p97
        $region42: #{scaled_dot_product_attention.1} parent=35 // pred_check_branch
          %318 = sbr.rel (%p316) target = $region44
        $region43: #{scaled_dot_product_attention.1} parent=35 // pred_region
          %319 = dma.done %s312, 1024
        $region44: #{scaled_dot_product_attention.1} parent=35 // pred_fallthru
          _
        %s320 = sand.u32 %s27, 1
        %s321 = scalar_lea.sflag [#allocation9], %s320
        %s322 = sand.u32 %s112, 1
        %s323 = smul.addr %s322, 64
        %s324 = scalar_lea.vmem [#allocation10], %s323
        // Predicated region
        $region45: #{scaled_dot_product_attention.1} parent=35 // pred_check
          %p325 = pneg %p125
        $region46: #{scaled_dot_product_attention.1} parent=35 // pred_check_branch
          %327 = sbr.rel (%p325) target = $region48
        $region47: #{scaled_dot_product_attention.1} parent=35 // pred_region
          %328 = dma.done %s321, 1024
        $region48: #{scaled_dot_product_attention.1} parent=35 // pred_fallthru
          _
        %s329 = sand.u32 %s142, 1
        %s330 = scalar_lea.sflag [#allocation12], %s329
        %s331 = sand.u32 %s142, 1
        %s332 = smul.addr %s331, 128
        %s333 = scalar_lea.vmem [#allocation11], %s332
        // Predicated region
        $region49: #{scaled_dot_product_attention.1} parent=35 // pred_check
          %p334 = pneg %p155
        $region50: #{scaled_dot_product_attention.1} parent=35 // pred_check_branch
          %336 = sbr.rel (%p334) target = $region52
        $region51: #{scaled_dot_product_attention.1} parent=35 // pred_region
          %337 = dma.done %s330, 2048
        $region52: #{scaled_dot_product_attention.1} parent=35 // pred_fallthru
          _
        %s338 = sand.u32 %s56, 1
        %s339 = scalar_lea.sflag [#allocation6], %s338
        %s340 = sand.u32 %s56, 1
        %s341 = smul.addr %s340, 64
        %s342 = scalar_lea.vmem [#allocation5], %s341
        %p343 = pneg %p69
        %p344 = pneg %p66
        %s345 = sand.u32 %s27, 1
        %s346 = scalar_lea.sflag [#allocation9], %s345
        %s347 = sand.u32 %s84, 1
        %s348 = smul.addr %s347, 64
        %s349 = scalar_lea.vmem [#allocation8], %s348
        %p350 = pneg %p97
        %p351 = pneg %p94
        %s352 = sand.u32 %s27, 1
        %s353 = scalar_lea.sflag [#allocation9], %s352
        %s354 = sand.u32 %s112, 1
        %s355 = smul.addr %s354, 64
        %s356 = scalar_lea.vmem [#allocation10], %s355
        %p357 = pneg %p125
        %p358 = pneg %p122
        %s359 = sand.u32 %s142, 1
        %s360 = scalar_lea.sflag [#allocation12], %s359
        %s361 = sand.u32 %s142, 1
        %s362 = smul.addr %s361, 128
        %s363 = scalar_lea.vmem [#allocation11], %s362
        %p364 = pneg %p155
        %p365 = pneg %p152
        %p366 = pneg %p183
        %p367 = pneg %p180
        %s368 = sand.u32 %s170, 1
        %s369 = scalar_lea.sflag [#allocation7], %s368
        %s370 = sand.u32 %s170, 1
        %s371 = smul.addr %s370, 64
        %s372 = scalar_lea.vmem [#allocation13], %s371
        %s373 = smul.u32 16, %s33
        %s374 = smul.u32 16, %s34
        %s375 = smul.u32 16, %s34
        %s376 = smul.u32 16, %s33
        %s377 = smul.u32 16, %s33
        %p380 = scmp.eq.s32.totalorder %s34, 0
        // Predicated region
        $region53: #{scaled_dot_product_attention.1} parent=35 // pred_check
          %p381 = pneg %p380
        $region54: #{scaled_dot_product_attention.1} parent=35 // pred_check_branch
          %383 = sbr.rel (%p381) target = $region56
        $region55: #{scaled_dot_product_attention.1} parent=35 // pred_region
          %vm384 = vcmask 7168
          %385 = vst.msk [vmem:[#allocation2] sm:$0xff] %vm384, -inf
          %386 = vst.msk [vmem:[#allocation2 + $0x8] sm:$0xff] %vm384, -inf
          %387 = vst.msk [vmem:[#allocation2 + $0x10] sm:$0xff] %vm384, -inf
          %388 = vst.msk [vmem:[#allocation2 + $0x18] sm:$0xff] %vm384, -inf
          %389 = vst.msk [vmem:[#allocation2 + $0x20] sm:$0xff] %vm384, -inf
          %390 = vst.msk [vmem:[#allocation2 + $0x28] sm:$0xff] %vm384, -inf
          %391 = vst.msk [vmem:[#allocation2 + $0x30] sm:$0xff] %vm384, -inf
          %392 = vst.msk [vmem:[#allocation2 + $0x38] sm:$0xff] %vm384, -inf
          %393 = vst.msk [vmem:[#allocation2 + $0x40] sm:$0xff] %vm384, -inf
          %394 = vst.msk [vmem:[#allocation2 + $0x48] sm:$0xff] %vm384, -inf
          %395 = vst.msk [vmem:[#allocation2 + $0x50] sm:$0xff] %vm384, -inf
          %396 = vst.msk [vmem:[#allocation2 + $0x58] sm:$0xff] %vm384, -inf
          %397 = vst.msk [vmem:[#allocation2 + $0x60] sm:$0xff] %vm384, -inf
          %398 = vst.msk [vmem:[#allocation2 + $0x68] sm:$0xff] %vm384, -inf
          %399 = vst.msk [vmem:[#allocation2 + $0x70] sm:$0xff] %vm384, -inf
          %400 = vst.msk [vmem:[#allocation2 + $0x78] sm:$0xff] %vm384, -inf
          %401 = vst.msk [vmem:[#allocation3] sm:$0xff] %vm384, 0.0
          %402 = vst.msk [vmem:[#allocation3 + $0x8] sm:$0xff] %vm384, 0.0
          %403 = vst.msk [vmem:[#allocation3 + $0x10] sm:$0xff] %vm384, 0.0
          %404 = vst.msk [vmem:[#allocation3 + $0x18] sm:$0xff] %vm384, 0.0
          %405 = vst.msk [vmem:[#allocation3 + $0x20] sm:$0xff] %vm384, 0.0
          %406 = vst.msk [vmem:[#allocation3 + $0x28] sm:$0xff] %vm384, 0.0
          %407 = vst.msk [vmem:[#allocation3 + $0x30] sm:$0xff] %vm384, 0.0
          %408 = vst.msk [vmem:[#allocation3 + $0x38] sm:$0xff] %vm384, 0.0
          %409 = vst.msk [vmem:[#allocation3 + $0x40] sm:$0xff] %vm384, 0.0
          %410 = vst.msk [vmem:[#allocation3 + $0x48] sm:$0xff] %vm384, 0.0
          %411 = vst.msk [vmem:[#allocation3 + $0x50] sm:$0xff] %vm384, 0.0
          %412 = vst.msk [vmem:[#allocation3 + $0x58] sm:$0xff] %vm384, 0.0
          %413 = vst.msk [vmem:[#allocation3 + $0x60] sm:$0xff] %vm384, 0.0
          %414 = vst.msk [vmem:[#allocation3 + $0x68] sm:$0xff] %vm384, 0.0
          %415 = vst.msk [vmem:[#allocation3 + $0x70] sm:$0xff] %vm384, 0.0
          %416 = vst.msk [vmem:[#allocation3 + $0x78] sm:$0xff] %vm384, 0.0
          %417 = vst [vmem:[#allocation4] sm:$0xff] 0.0
          %418 = vst [vmem:[#allocation4 + $0x8] sm:$0xff] 0.0
          %419 = vst [vmem:[#allocation4 + $0x10] sm:$0xff] 0.0
          %420 = vst [vmem:[#allocation4 + $0x18] sm:$0xff] 0.0
          %421 = vst [vmem:[#allocation4 + $0x20] sm:$0xff] 0.0
          %422 = vst [vmem:[#allocation4 + $0x28] sm:$0xff] 0.0
          %423 = vst [vmem:[#allocation4 + $0x30] sm:$0xff] 0.0
          %424 = vst [vmem:[#allocation4 + $0x38] sm:$0xff] 0.0
          %425 = vst [vmem:[#allocation4 + $0x40] sm:$0xff] 0.0
          %426 = vst [vmem:[#allocation4 + $0x48] sm:$0xff] 0.0
          %427 = vst [vmem:[#allocation4 + $0x50] sm:$0xff] 0.0
          %428 = vst [vmem:[#allocation4 + $0x58] sm:$0xff] 0.0
          %429 = vst [vmem:[#allocation4 + $0x60] sm:$0xff] 0.0
          %430 = vst [vmem:[#allocation4 + $0x68] sm:$0xff] 0.0
          %431 = vst [vmem:[#allocation4 + $0x70] sm:$0xff] 0.0
          %432 = vst [vmem:[#allocation4 + $0x78] sm:$0xff] 0.0
        $region56: #{scaled_dot_product_attention.1} parent=35 // pred_fallthru
          _
        %v433 = vld [vmem:[%s306] sm:$0xf]
        %v434 = vld [vmem:[%s306 + $0x4] sm:$0xf]
        %v435 = vld [vmem:[%s306 + $0x8] sm:$0xf]
        %v436 = vld [vmem:[%s306 + $0xc] sm:$0xf]
        %v437 = vld [vmem:[%s306 + $0x10] sm:$0xf]
        %v438 = vld [vmem:[%s306 + $0x14] sm:$0xf]
        %v439 = vld [vmem:[%s306 + $0x18] sm:$0xf]
        %v440 = vld [vmem:[%s306 + $0x1c] sm:$0xf]
        %v441 = vld [vmem:[%s306 + $0x20] sm:$0xf]
        %v442 = vld [vmem:[%s306 + $0x24] sm:$0xf]
        %v443 = vld [vmem:[%s306 + $0x28] sm:$0xf]
        %v444 = vld [vmem:[%s306 + $0x2c] sm:$0xf]
        %v445 = vld [vmem:[%s306 + $0x30] sm:$0xf]
        %v446 = vld [vmem:[%s306 + $0x34] sm:$0xf]
        %v447 = vld [vmem:[%s306 + $0x38] sm:$0xf]
        %v448 = vld [vmem:[%s306 + $0x3c] sm:$0xf]
        %v449 = vmul.bf16 %v433, 1035287989
        %v450 = vmul.bf16 %v434, 1035287989
        %v451 = vmul.bf16 %v435, 1035287989
        %v452 = vmul.bf16 %v436, 1035287989
        %v453 = vmul.bf16 %v437, 1035287989
        %v454 = vmul.bf16 %v438, 1035287989
        %v455 = vmul.bf16 %v439, 1035287989
        %v456 = vmul.bf16 %v440, 1035287989
        %v457 = vmul.bf16 %v441, 1035287989
        %v458 = vmul.bf16 %v442, 1035287989
        %v459 = vmul.bf16 %v443, 1035287989
        %v460 = vmul.bf16 %v444, 1035287989
        %v461 = vmul.bf16 %v445, 1035287989
        %v462 = vmul.bf16 %v446, 1035287989
        %v463 = vmul.bf16 %v447, 1035287989
        %v464 = vmul.bf16 %v448, 1035287989
        %v465 = vld [vmem:[%s315] sm:$0xf]
        %v466 = vld [vmem:[%s315 + $0x4] sm:$0xf]
        %v467 = vld [vmem:[%s315 + $0x8] sm:$0xf]
        %v468 = vld [vmem:[%s315 + $0xc] sm:$0xf]
        %v469 = vld [vmem:[%s315 + $0x10] sm:$0xf]
        %v470 = vld [vmem:[%s315 + $0x14] sm:$0xf]
        %v471 = vld [vmem:[%s315 + $0x18] sm:$0xf]
        %v472 = vld [vmem:[%s315 + $0x1c] sm:$0xf]
        %v473 = vld [vmem:[%s315 + $0x20] sm:$0xf]
        %v474 = vld [vmem:[%s315 + $0x24] sm:$0xf]
        %v475 = vld [vmem:[%s315 + $0x28] sm:$0xf]
        %v476 = vld [vmem:[%s315 + $0x2c] sm:$0xf]
        %v477 = vld [vmem:[%s315 + $0x30] sm:$0xf]
        %v478 = vld [vmem:[%s315 + $0x34] sm:$0xf]
        %v479 = vld [vmem:[%s315 + $0x38] sm:$0xf]
        %v480 = vld [vmem:[%s315 + $0x3c] sm:$0xf]
        %v481 = vld [vmem:[%s324] sm:$0xf]
        %v482 = vld [vmem:[%s324 + $0x4] sm:$0xf]
        %v483 = vld [vmem:[%s324 + $0x8] sm:$0xf]
        %v484 = vld [vmem:[%s324 + $0xc] sm:$0xf]
        %v485 = vld [vmem:[%s324 + $0x10] sm:$0xf]
        %v486 = vld [vmem:[%s324 + $0x14] sm:$0xf]
        %v487 = vld [vmem:[%s324 + $0x18] sm:$0xf]
        %v488 = vld [vmem:[%s324 + $0x1c] sm:$0xf]
        %v489 = vld [vmem:[%s324 + $0x20] sm:$0xf]
        %v490 = vld [vmem:[%s324 + $0x24] sm:$0xf]
        %v491 = vld [vmem:[%s324 + $0x28] sm:$0xf]
        %v492 = vld [vmem:[%s324 + $0x2c] sm:$0xf]
        %v493 = vld [vmem:[%s324 + $0x30] sm:$0xf]
        %v494 = vld [vmem:[%s324 + $0x34] sm:$0xf]
        %v495 = vld [vmem:[%s324 + $0x38] sm:$0xf]
        %v496 = vld [vmem:[%s324 + $0x3c] sm:$0xf]
        %v497 = vld [vmem:[%s333] sm:$0xff]
        %v498 = vld [vmem:[%s333 + $0x8] sm:$0xff]
        %v499 = vld [vmem:[%s333 + $0x10] sm:$0xff]
        %v500 = vld [vmem:[%s333 + $0x18] sm:$0xff]
        %v501 = vld [vmem:[%s333 + $0x20] sm:$0xff]
        %v502 = vld [vmem:[%s333 + $0x28] sm:$0xff]
        %v503 = vld [vmem:[%s333 + $0x30] sm:$0xff]
        %v504 = vld [vmem:[%s333 + $0x38] sm:$0xff]
        %v505 = vld [vmem:[%s333 + $0x40] sm:$0xff]
        %v506 = vld [vmem:[%s333 + $0x48] sm:$0xff]
        %v507 = vld [vmem:[%s333 + $0x50] sm:$0xff]
        %v508 = vld [vmem:[%s333 + $0x58] sm:$0xff]
        %v509 = vld [vmem:[%s333 + $0x60] sm:$0xff]
        %v510 = vld [vmem:[%s333 + $0x68] sm:$0xff]
        %v511 = vld [vmem:[%s333 + $0x70] sm:$0xff]
        %v512 = vld [vmem:[%s333 + $0x78] sm:$0xff]
        %v529 = vunpack.c.l.b16 %v449
        %v530 = vunpack.c.l.b16 %v450
        %v531 = vunpack.c.l.b16 %v451
        %v532 = vunpack.c.l.b16 %v452
        %v533 = vunpack.c.l.b16 %v453
        %v534 = vunpack.c.l.b16 %v454
        %v535 = vunpack.c.l.b16 %v455
        %v536 = vunpack.c.l.b16 %v456
        %v537 = vunpack.c.l.b16 %v457
        %v538 = vunpack.c.l.b16 %v458
        %v539 = vunpack.c.l.b16 %v459
        %v540 = vunpack.c.l.b16 %v460
        %v541 = vunpack.c.l.b16 %v461
        %v542 = vunpack.c.l.b16 %v462
        %v543 = vunpack.c.l.b16 %v463
        %v544 = vunpack.c.l.b16 %v464
        %v545 = vpack.c.b16 %v530, %v529
        %v546 = vpack.c.b16 %v532, %v531
        %v547 = vpack.c.b16 %v534, %v533
        %v548 = vpack.c.b16 %v536, %v535
        %v549 = vpack.c.b16 %v538, %v537
        %v550 = vpack.c.b16 %v540, %v539
        %v551 = vpack.c.b16 %v542, %v541
        %v552 = vpack.c.b16 %v544, %v543
        %v577 = vunpack.c.l.b16 %v465
        %v578 = vunpack.c.l.b16 %v466
        %v579 = vunpack.c.l.b16 %v467
        %v580 = vunpack.c.l.b16 %v468
        %v581 = vunpack.c.l.b16 %v469
        %v582 = vunpack.c.l.b16 %v470
        %v583 = vunpack.c.l.b16 %v471
        %v584 = vunpack.c.l.b16 %v472
        %v585 = vunpack.c.l.b16 %v473
        %v586 = vunpack.c.l.b16 %v474
        %v587 = vunpack.c.l.b16 %v475
        %v588 = vunpack.c.l.b16 %v476
        %v589 = vunpack.c.l.b16 %v477
        %v590 = vunpack.c.l.b16 %v478
        %v591 = vunpack.c.l.b16 %v479
        %v592 = vunpack.c.l.b16 %v480
        %v593 = vpack.c.b16 %v578, %v577
        %v594 = vpack.c.b16 %v580, %v579
        %v595 = vpack.c.b16 %v582, %v581
        %v596 = vpack.c.b16 %v584, %v583
        %v597 = vpack.c.b16 %v586, %v585
        %v598 = vpack.c.b16 %v588, %v587
        %v599 = vpack.c.b16 %v590, %v589
        %v600 = vpack.c.b16 %v592, %v591
        %609 = vmatprep.subr.bf16.mxu0 0
        %610 = vmatpush1.bf16.xpose.msra.mxu0 %v593
        %611 = vmatprep.subr.bf16.mxu0 0
        %612 = vmatpush1.bf16.xpose.msra.mxu0 %v594
        %613 = vmatprep.subr.bf16.mxu0 0
        %614 = vmatpush1.bf16.xpose.msra.mxu0 %v595
        %615 = vmatprep.subr.bf16.mxu0 0
        %616 = vmatpush1.bf16.xpose.msra.mxu0 %v596
        %617 = vmatprep.subr.bf16.mxu0 0
        %618 = vmatpush1.bf16.xpose.msra.mxu0 %v597
        %619 = vmatprep.subr.bf16.mxu0 0
        %620 = vmatpush1.bf16.xpose.msra.mxu0 %v598
        %621 = vmatprep.subr.bf16.mxu0 0
        %622 = vmatpush1.bf16.xpose.msra.mxu0 %v599
        %623 = vmatprep.subr.bf16.mxu0 0
        %624 = vmatpush1.bf16.xpose.msra.mxu0 %v600
        %625 = vmatprep.subr.bf16.mxu0 0
        %626 = vmatpush1.bf16.xpose.msra.mxu0 0
        %627 = vmatprep.subr.bf16.mxu0 0
        %628 = vmatpush1.bf16.xpose.msra.mxu0 0
        %629 = vmatprep.subr.bf16.mxu0 0
        %630 = vmatpush1.bf16.xpose.msra.mxu0 0
        %631 = vmatprep.subr.bf16.mxu0 0
        %632 = vmatpush1.bf16.xpose.msra.mxu0 0
        %633 = vmatprep.subr.bf16.mxu0 0
        %634 = vmatpush1.bf16.xpose.msra.mxu0 0
        %635 = vmatprep.subr.bf16.mxu0 0
        %636 = vmatpush1.bf16.xpose.msra.mxu0 0
        %637 = vmatprep.subr.bf16.mxu0 0
        %638 = vmatpush1.bf16.xpose.msra.mxu0 0
        %639 = vmatprep.subr.bf16.mxu0 0
        %640 = vmatpush1.bf16.xpose.msra.mxu0 0
        %641 = vmatprep.mubr.bf16.mxu0 0
        %642 = vmatmul.mubr.bf16.gmra.mrb[0].mxu0 %v545
        %v643 = vpop.f32.mrb[0].mxu0
        %v644 = vadd.f32 0.0, %v643
        %v645 = vpop.f32.mrb[0].mxu0
        %v646 = vpop.f32.mrb[0].mxu0
        %v647 = vadd.f32 0.0, %v646
        %v648 = vpop.f32.mrb[0].mxu0
        %649 = vmatprep.mubr.bf16.mxu0 0
        %650 = vmatmul.mubr.bf16.gmra.mrb[0].mxu0 %v546
        %v651 = vpop.f32.mrb[0].mxu0
        %v652 = vadd.f32 0.0, %v651
        %v653 = vpop.f32.mrb[0].mxu0
        %v654 = vpop.f32.mrb[0].mxu0
        %v655 = vadd.f32 0.0, %v654
        %v656 = vpop.f32.mrb[0].mxu0
        %657 = vmatprep.mubr.bf16.mxu0 0
        %658 = vmatmul.mubr.bf16.gmra.mrb[0].mxu0 %v547
        %v659 = vpop.f32.mrb[0].mxu0
        %v660 = vadd.f32 0.0, %v659
        %v661 = vpop.f32.mrb[0].mxu0
        %v662 = vpop.f32.mrb[0].mxu0
        %v663 = vadd.f32 0.0, %v662
        %v664 = vpop.f32.mrb[0].mxu0
        %665 = vmatprep.mubr.bf16.mxu0 0
        %666 = vmatmul.mubr.bf16.gmra.mrb[0].mxu0 %v548
        %v667 = vpop.f32.mrb[0].mxu0
        %v668 = vadd.f32 0.0, %v667
        %v669 = vpop.f32.mrb[0].mxu0
        %v670 = vpop.f32.mrb[0].mxu0
        %v671 = vadd.f32 0.0, %v670
        %v672 = vpop.f32.mrb[0].mxu0
        %673 = vmatprep.mubr.bf16.mxu0 0
        %674 = vmatmul.mubr.bf16.gmra.mrb[0].mxu0 %v549
        %v675 = vpop.f32.mrb[0].mxu0
        %v676 = vadd.f32 0.0, %v675
        %v677 = vpop.f32.mrb[0].mxu0
        %v678 = vpop.f32.mrb[0].mxu0
        %v679 = vadd.f32 0.0, %v678
        %v680 = vpop.f32.mrb[0].mxu0
        %681 = vmatprep.mubr.bf16.mxu0 0
        %682 = vmatmul.mubr.bf16.gmra.mrb[0].mxu0 %v550
        %v683 = vpop.f32.mrb[0].mxu0
        %v684 = vadd.f32 0.0, %v683
        %v685 = vpop.f32.mrb[0].mxu0
        %v686 = vpop.f32.mrb[0].mxu0
        %v687 = vadd.f32 0.0, %v686
        %v688 = vpop.f32.mrb[0].mxu0
        %689 = vmatprep.mubr.bf16.mxu0 0
        %690 = vmatmul.mubr.bf16.gmra.mrb[0].mxu0 %v551
        %v691 = vpop.f32.mrb[0].mxu0
        %v692 = vadd.f32 0.0, %v691
        %v693 = vpop.f32.mrb[0].mxu0
        %v694 = vpop.f32.mrb[0].mxu0
        %v695 = vadd.f32 0.0, %v694
        %v696 = vpop.f32.mrb[0].mxu0
        %697 = vmatprep.mubr.bf16.mxu0 0
        %698 = vmatmul.mubr.bf16.gmra.mrb[0].mxu0 %v552
        %v699 = vpop.f32.mrb[0].mxu0
        %v700 = vadd.f32 0.0, %v699
        %v701 = vpop.f32.mrb[0].mxu0
        %v702 = vpop.f32.mrb[0].mxu0
        %v703 = vadd.f32 0.0, %v702
        %v704 = vpop.f32.mrb[0].mxu0
        %705 = vdwg.mxu0
        %vm706 = vcmp.eq.f32.partialorder %v497, 0.0
        %vm707 = vcmp.eq.f32.partialorder %v498, 0.0
        %vm708 = vcmp.eq.f32.partialorder %v499, 0.0
        %vm709 = vcmp.eq.f32.partialorder %v500, 0.0
        %vm710 = vcmp.eq.f32.partialorder %v501, 0.0
        %vm711 = vcmp.eq.f32.partialorder %v502, 0.0
        %vm712 = vcmp.eq.f32.partialorder %v503, 0.0
        %vm713 = vcmp.eq.f32.partialorder %v504, 0.0
        %vm714 = vcmp.eq.f32.partialorder %v505, 0.0
        %vm715 = vcmp.eq.f32.partialorder %v506, 0.0
        %vm716 = vcmp.eq.f32.partialorder %v507, 0.0
        %vm717 = vcmp.eq.f32.partialorder %v508, 0.0
        %vm718 = vcmp.eq.f32.partialorder %v509, 0.0
        %vm719 = vcmp.eq.f32.partialorder %v510, 0.0
        %vm720 = vcmp.eq.f32.partialorder %v511, 0.0
        %vm721 = vcmp.eq.f32.partialorder %v512, 0.0
        %v722 = vsel %vm706, -inf, %v644
        %v723 = vsel %vm707, -inf, %v647
        %v724 = vsel %vm708, -inf, %v652
        %v725 = vsel %vm709, -inf, %v655
        %v726 = vsel %vm710, -inf, %v660
        %v727 = vsel %vm711, -inf, %v663
        %v728 = vsel %vm712, -inf, %v668
        %v729 = vsel %vm713, -inf, %v671
        %v730 = vsel %vm714, -inf, %v676
        %v731 = vsel %vm715, -inf, %v679
        %v732 = vsel %vm716, -inf, %v684
        %v733 = vsel %vm717, -inf, %v687
        %v734 = vsel %vm718, -inf, %v692
        %v735 = vsel %vm719, -inf, %v695
        %v736 = vsel %vm720, -inf, %v700
        %v737 = vsel %vm721, -inf, %v703
        %v738 = vld [vmem:[#allocation2] sm:$0xff]
        %v739 = vld [vmem:[#allocation2 + $0x8] sm:$0xff]
        %v740 = vld [vmem:[#allocation2 + $0x10] sm:$0xff]
        %v741 = vld [vmem:[#allocation2 + $0x18] sm:$0xff]
        %v742 = vld [vmem:[#allocation2 + $0x20] sm:$0xff]
        %v743 = vld [vmem:[#allocation2 + $0x28] sm:$0xff]
        %v744 = vld [vmem:[#allocation2 + $0x30] sm:$0xff]
        %v745 = vld [vmem:[#allocation2 + $0x38] sm:$0xff]
        %v746 = vld [vmem:[#allocation2 + $0x40] sm:$0xff]
        %v747 = vld [vmem:[#allocation2 + $0x48] sm:$0xff]
        %v748 = vld [vmem:[#allocation2 + $0x50] sm:$0xff]
        %v749 = vld [vmem:[#allocation2 + $0x58] sm:$0xff]
        %v750 = vld [vmem:[#allocation2 + $0x60] sm:$0xff]
        %v751 = vld [vmem:[#allocation2 + $0x68] sm:$0xff]
        %v752 = vld [vmem:[#allocation2 + $0x70] sm:$0xff]
        %v753 = vld [vmem:[#allocation2 + $0x78] sm:$0xff]
        %754 = vmax.xlane.f32.xlu0 %v722
        %v755 = vpop.xlane.xlu0 %754
        %756 = vmax.xlane.f32.xlu0 %v723
        %v757 = vpop.xlane.xlu0 %756
        %758 = vmax.xlane.f32.xlu0 %v724
        %v759 = vpop.xlane.xlu0 %758
        %760 = vmax.xlane.f32.xlu0 %v725
        %v761 = vpop.xlane.xlu0 %760
        %762 = vmax.xlane.f32.xlu0 %v726
        %v763 = vpop.xlane.xlu0 %762
        %764 = vmax.xlane.f32.xlu0 %v727
        %v765 = vpop.xlane.xlu0 %764
        %766 = vmax.xlane.f32.xlu0 %v728
        %v767 = vpop.xlane.xlu0 %766
        %768 = vmax.xlane.f32.xlu0 %v729
        %v769 = vpop.xlane.xlu0 %768
        %770 = vmax.xlane.f32.xlu0 %v730
        %v771 = vpop.xlane.xlu0 %770
        %772 = vmax.xlane.f32.xlu0 %v731
        %v773 = vpop.xlane.xlu0 %772
        %774 = vmax.xlane.f32.xlu0 %v732
        %v775 = vpop.xlane.xlu0 %774
        %776 = vmax.xlane.f32.xlu0 %v733
        %v777 = vpop.xlane.xlu0 %776
        %778 = vmax.xlane.f32.xlu0 %v734
        %v779 = vpop.xlane.xlu0 %778
        %780 = vmax.xlane.f32.xlu0 %v735
        %v781 = vpop.xlane.xlu0 %780
        %782 = vmax.xlane.f32.xlu0 %v736
        %v783 = vpop.xlane.xlu0 %782
        %784 = vmax.xlane.f32.xlu0 %v737
        %v785 = vpop.xlane.xlu0 %784
        %v786 = vmax.f32 %v738, %v755
        %v787 = vmax.f32 %v739, %v757
        %v788 = vmax.f32 %v740, %v759
        %v789 = vmax.f32 %v741, %v761
        %v790 = vmax.f32 %v742, %v763
        %v791 = vmax.f32 %v743, %v765
        %v792 = vmax.f32 %v744, %v767
        %v793 = vmax.f32 %v745, %v769
        %v794 = vmax.f32 %v746, %v771
        %v795 = vmax.f32 %v747, %v773
        %v796 = vmax.f32 %v748, %v775
        %v797 = vmax.f32 %v749, %v777
        %v798 = vmax.f32 %v750, %v779
        %v799 = vmax.f32 %v751, %v781
        %v800 = vmax.f32 %v752, %v783
        %v801 = vmax.f32 %v753, %v785
        %vm802 = vcmp.eq.f32.partialorder %v786, -inf
        %vm803 = vcmp.eq.f32.partialorder %v787, -inf
        %vm804 = vcmp.eq.f32.partialorder %v788, -inf
        %vm805 = vcmp.eq.f32.partialorder %v789, -inf
        %vm806 = vcmp.eq.f32.partialorder %v790, -inf
        %vm807 = vcmp.eq.f32.partialorder %v791, -inf
        %vm808 = vcmp.eq.f32.partialorder %v792, -inf
        %vm809 = vcmp.eq.f32.partialorder %v793, -inf
        %vm810 = vcmp.eq.f32.partialorder %v794, -inf
        %vm811 = vcmp.eq.f32.partialorder %v795, -inf
        %vm812 = vcmp.eq.f32.partialorder %v796, -inf
        %vm813 = vcmp.eq.f32.partialorder %v797, -inf
        %vm814 = vcmp.eq.f32.partialorder %v798, -inf
        %vm815 = vcmp.eq.f32.partialorder %v799, -inf
        %vm816 = vcmp.eq.f32.partialorder %v800, -inf
        %vm817 = vcmp.eq.f32.partialorder %v801, -inf
        %v818 = vsel %vm802, 0.0, %v786
        %v819 = vsel %vm803, 0.0, %v787
        %v820 = vsel %vm804, 0.0, %v788
        %v821 = vsel %vm805, 0.0, %v789
        %v822 = vsel %vm806, 0.0, %v790
        %v823 = vsel %vm807, 0.0, %v791
        %v824 = vsel %vm808, 0.0, %v792
        %v825 = vsel %vm809, 0.0, %v793
        %v826 = vsel %vm810, 0.0, %v794
        %v827 = vsel %vm811, 0.0, %v795
        %v828 = vsel %vm812, 0.0, %v796
        %v829 = vsel %vm813, 0.0, %v797
        %v830 = vsel %vm814, 0.0, %v798
        %v831 = vsel %vm815, 0.0, %v799
        %v832 = vsel %vm816, 0.0, %v800
        %v833 = vsel %vm817, 0.0, %v801
        %v834 = vsub.f32 %v738, %v818
        %v835 = vsub.f32 %v739, %v819
        %v836 = vsub.f32 %v740, %v820
        %v837 = vsub.f32 %v741, %v821
        %v838 = vsub.f32 %v742, %v822
        %v839 = vsub.f32 %v743, %v823
        %v840 = vsub.f32 %v744, %v824
        %v841 = vsub.f32 %v745, %v825
        %v842 = vsub.f32 %v746, %v826
        %v843 = vsub.f32 %v747, %v827
        %v844 = vsub.f32 %v748, %v828
        %v845 = vsub.f32 %v749, %v829
        %v846 = vsub.f32 %v750, %v830
        %v847 = vsub.f32 %v751, %v831
        %v848 = vsub.f32 %v752, %v832
        %v849 = vsub.f32 %v753, %v833
        %v850 = vmul.f32 %v834, 1.442695
        %v851 = vpow.pop %v850
        %v852 = vmul.f32 %v835, 1.442695
        %v853 = vpow.pop %v852
        %v854 = vmul.f32 %v836, 1.442695
        %v855 = vpow.pop %v854
        %v856 = vmul.f32 %v837, 1.442695
        %v857 = vpow.pop %v856
        %v858 = vmul.f32 %v838, 1.442695
        %v859 = vpow.pop %v858
        %v860 = vmul.f32 %v839, 1.442695
        %v861 = vpow.pop %v860
        %v862 = vmul.f32 %v840, 1.442695
        %v863 = vpow.pop %v862
        %v864 = vmul.f32 %v841, 1.442695
        %v865 = vpow.pop %v864
        %v866 = vmul.f32 %v842, 1.442695
        %v867 = vpow.pop %v866
        %v868 = vmul.f32 %v843, 1.442695
        %v869 = vpow.pop %v868
        %v870 = vmul.f32 %v844, 1.442695
        %v871 = vpow.pop %v870
        %v872 = vmul.f32 %v845, 1.442695
        %v873 = vpow.pop %v872
        %v874 = vmul.f32 %v846, 1.442695
        %v875 = vpow.pop %v874
        %v876 = vmul.f32 %v847, 1.442695
        %v877 = vpow.pop %v876
        %v878 = vmul.f32 %v848, 1.442695
        %v879 = vpow.pop %v878
        %v880 = vmul.f32 %v849, 1.442695
        %v881 = vpow.pop %v880
        %883 = vset.pattern.permute.xlu0 0
        %884 = vperm.xlu0 %883, %v818
        %v885 = vpop.permute.xlu0 %884
        %888 = vset.pattern.permute.xlu0 0
        %889 = vperm.xlu0 %888, %v819
        %v890 = vpop.permute.xlu0 %889
        %893 = vset.pattern.permute.xlu0 0
        %894 = vperm.xlu0 %893, %v820
        %v895 = vpop.permute.xlu0 %894
        %898 = vset.pattern.permute.xlu0 0
        %899 = vperm.xlu0 %898, %v821
        %v900 = vpop.permute.xlu0 %899
        %903 = vset.pattern.permute.xlu0 0
        %904 = vperm.xlu0 %903, %v822
        %v905 = vpop.permute.xlu0 %904
        %908 = vset.pattern.permute.xlu0 0
        %909 = vperm.xlu0 %908, %v823
        %v910 = vpop.permute.xlu0 %909
        %913 = vset.pattern.permute.xlu0 0
        %914 = vperm.xlu0 %913, %v824
        %v915 = vpop.permute.xlu0 %914
        %918 = vset.pattern.permute.xlu0 0
        %919 = vperm.xlu0 %918, %v825
        %v920 = vpop.permute.xlu0 %919
        %923 = vset.pattern.permute.xlu0 0
        %924 = vperm.xlu0 %923, %v826
        %v925 = vpop.permute.xlu0 %924
        %928 = vset.pattern.permute.xlu0 0
        %929 = vperm.xlu0 %928, %v827
        %v930 = vpop.permute.xlu0 %929
        %933 = vset.pattern.permute.xlu0 0
        %934 = vperm.xlu0 %933, %v828
        %v935 = vpop.permute.xlu0 %934
        %938 = vset.pattern.permute.xlu0 0
        %939 = vperm.xlu0 %938, %v829
        %v940 = vpop.permute.xlu0 %939
        %943 = vset.pattern.permute.xlu0 0
        %944 = vperm.xlu0 %943, %v830
        %v945 = vpop.permute.xlu0 %944
        %948 = vset.pattern.permute.xlu0 0
        %949 = vperm.xlu0 %948, %v831
        %v950 = vpop.permute.xlu0 %949
        %953 = vset.pattern.permute.xlu0 0
        %954 = vperm.xlu0 %953, %v832
        %v955 = vpop.permute.xlu0 %954
        %958 = vset.pattern.permute.xlu0 0
        %959 = vperm.xlu0 %958, %v833
        %v960 = vpop.permute.xlu0 %959
        %v962 = vsub.f32 %v722, %v885
        %v963 = vsub.f32 %v723, %v890
        %v964 = vsub.f32 %v724, %v895
        %v965 = vsub.f32 %v725, %v900
        %v966 = vsub.f32 %v726, %v905
        %v967 = vsub.f32 %v727, %v910
        %v968 = vsub.f32 %v728, %v915
        %v969 = vsub.f32 %v729, %v920
        %v970 = vsub.f32 %v730, %v925
        %v971 = vsub.f32 %v731, %v930
        %v972 = vsub.f32 %v732, %v935
        %v973 = vsub.f32 %v733, %v940
        %v974 = vsub.f32 %v734, %v945
        %v975 = vsub.f32 %v735, %v950
        %v976 = vsub.f32 %v736, %v955
        %v977 = vsub.f32 %v737, %v960
        %v978 = vmul.f32 %v962, 1.442695
        %v979 = vpow.pop %v978
        %v980 = vmul.f32 %v963, 1.442695
        %v981 = vpow.pop %v980
        %v982 = vmul.f32 %v964, 1.442695
        %v983 = vpow.pop %v982
        %v984 = vmul.f32 %v965, 1.442695
        %v985 = vpow.pop %v984
        %v986 = vmul.f32 %v966, 1.442695
        %v987 = vpow.pop %v986
        %v988 = vmul.f32 %v967, 1.442695
        %v989 = vpow.pop %v988
        %v990 = vmul.f32 %v968, 1.442695
        %v991 = vpow.pop %v990
        %v992 = vmul.f32 %v969, 1.442695
        %v993 = vpow.pop %v992
        %v994 = vmul.f32 %v970, 1.442695
        %v995 = vpow.pop %v994
        %v996 = vmul.f32 %v971, 1.442695
        %v997 = vpow.pop %v996
        %v998 = vmul.f32 %v972, 1.442695
        %v999 = vpow.pop %v998
        %v1000 = vmul.f32 %v973, 1.442695
        %v1001 = vpow.pop %v1000
        %v1002 = vmul.f32 %v974, 1.442695
        %v1003 = vpow.pop %v1002
        %v1004 = vmul.f32 %v975, 1.442695
        %v1005 = vpow.pop %v1004
        %v1006 = vmul.f32 %v976, 1.442695
        %v1007 = vpow.pop %v1006
        %v1008 = vmul.f32 %v977, 1.442695
        %v1009 = vpow.pop %v1008
        %v1010 = vld [vmem:[#allocation3] sm:$0xff]
        %v1011 = vld [vmem:[#allocation3 + $0x8] sm:$0xff]
        %v1012 = vld [vmem:[#allocation3 + $0x10] sm:$0xff]
        %v1013 = vld [vmem:[#allocation3 + $0x18] sm:$0xff]
        %v1014 = vld [vmem:[#allocation3 + $0x20] sm:$0xff]
        %v1015 = vld [vmem:[#allocation3 + $0x28] sm:$0xff]
        %v1016 = vld [vmem:[#allocation3 + $0x30] sm:$0xff]
        %v1017 = vld [vmem:[#allocation3 + $0x38] sm:$0xff]
        %v1018 = vld [vmem:[#allocation3 + $0x40] sm:$0xff]
        %v1019 = vld [vmem:[#allocation3 + $0x48] sm:$0xff]
        %v1020 = vld [vmem:[#allocation3 + $0x50] sm:$0xff]
        %v1021 = vld [vmem:[#allocation3 + $0x58] sm:$0xff]
        %v1022 = vld [vmem:[#allocation3 + $0x60] sm:$0xff]
        %v1023 = vld [vmem:[#allocation3 + $0x68] sm:$0xff]
        %v1024 = vld [vmem:[#allocation3 + $0x70] sm:$0xff]
        %v1025 = vld [vmem:[#allocation3 + $0x78] sm:$0xff]
        %v1026 = vmul.f32 %v851, %v1010
        %v1027 = vmul.f32 %v853, %v1011
        %v1028 = vmul.f32 %v855, %v1012
        %v1029 = vmul.f32 %v857, %v1013
        %v1030 = vmul.f32 %v859, %v1014
        %v1031 = vmul.f32 %v861, %v1015
        %v1032 = vmul.f32 %v863, %v1016
        %v1033 = vmul.f32 %v865, %v1017
        %v1034 = vmul.f32 %v867, %v1018
        %v1035 = vmul.f32 %v869, %v1019
        %v1036 = vmul.f32 %v871, %v1020
        %v1037 = vmul.f32 %v873, %v1021
        %v1038 = vmul.f32 %v875, %v1022
        %v1039 = vmul.f32 %v877, %v1023
        %v1040 = vmul.f32 %v879, %v1024
        %v1041 = vmul.f32 %v881, %v1025
        %1042 = vadd.xlane.f32.xlu0 %v979
        %v1043 = vpop.xlane.xlu0 %1042
        %1044 = vadd.xlane.f32.xlu0 %v981
        %v1045 = vpop.xlane.xlu0 %1044
        %1046 = vadd.xlane.f32.xlu0 %v983
        %v1047 = vpop.xlane.xlu0 %1046
        %1048 = vadd.xlane.f32.xlu0 %v985
        %v1049 = vpop.xlane.xlu0 %1048
        %1050 = vadd.xlane.f32.xlu0 %v987
        %v1051 = vpop.xlane.xlu0 %1050
        %1052 = vadd.xlane.f32.xlu0 %v989
        %v1053 = vpop.xlane.xlu0 %1052
        %1054 = vadd.xlane.f32.xlu0 %v991
        %v1055 = vpop.xlane.xlu0 %1054
        %1056 = vadd.xlane.f32.xlu0 %v993
        %v1057 = vpop.xlane.xlu0 %1056
        %1058 = vadd.xlane.f32.xlu0 %v995
        %v1059 = vpop.xlane.xlu0 %1058
        %1060 = vadd.xlane.f32.xlu0 %v997
        %v1061 = vpop.xlane.xlu0 %1060
        %1062 = vadd.xlane.f32.xlu0 %v999
        %v1063 = vpop.xlane.xlu0 %1062
        %1064 = vadd.xlane.f32.xlu0 %v1001
        %v1065 = vpop.xlane.xlu0 %1064
        %1066 = vadd.xlane.f32.xlu0 %v1003
        %v1067 = vpop.xlane.xlu0 %1066
        %1068 = vadd.xlane.f32.xlu0 %v1005
        %v1069 = vpop.xlane.xlu0 %1068
        %1070 = vadd.xlane.f32.xlu0 %v1007
        %v1071 = vpop.xlane.xlu0 %1070
        %1072 = vadd.xlane.f32.xlu0 %v1009
        %v1073 = vpop.xlane.xlu0 %1072
        %v1074 = vadd.f32 %v1026, %v1043
        %v1075 = vadd.f32 %v1027, %v1045
        %v1076 = vadd.f32 %v1028, %v1047
        %v1077 = vadd.f32 %v1029, %v1049
        %v1078 = vadd.f32 %v1030, %v1051
        %v1079 = vadd.f32 %v1031, %v1053
        %v1080 = vadd.f32 %v1032, %v1055
        %v1081 = vadd.f32 %v1033, %v1057
        %v1082 = vadd.f32 %v1034, %v1059
        %v1083 = vadd.f32 %v1035, %v1061
        %v1084 = vadd.f32 %v1036, %v1063
        %v1085 = vadd.f32 %v1037, %v1065
        %v1086 = vadd.f32 %v1038, %v1067
        %v1087 = vadd.f32 %v1039, %v1069
        %v1088 = vadd.f32 %v1040, %v1071
        %v1089 = vadd.f32 %v1041, %v1073
        %vm1090 = vcmask 7168
        %1091 = vst.msk [vmem:[#allocation3] sm:$0xff] %vm1090, %v1074
        %1092 = vst.msk [vmem:[#allocation3 + $0x8] sm:$0xff] %vm1090, %v1075
        %1093 = vst.msk [vmem:[#allocation3 + $0x10] sm:$0xff] %vm1090, %v1076
        %1094 = vst.msk [vmem:[#allocation3 + $0x18] sm:$0xff] %vm1090, %v1077
        %1095 = vst.msk [vmem:[#allocation3 + $0x20] sm:$0xff] %vm1090, %v1078
        %1096 = vst.msk [vmem:[#allocation3 + $0x28] sm:$0xff] %vm1090, %v1079
        %1097 = vst.msk [vmem:[#allocation3 + $0x30] sm:$0xff] %vm1090, %v1080
        %1098 = vst.msk [vmem:[#allocation3 + $0x38] sm:$0xff] %vm1090, %v1081
        %1099 = vst.msk [vmem:[#allocation3 + $0x40] sm:$0xff] %vm1090, %v1082
        %1100 = vst.msk [vmem:[#allocation3 + $0x48] sm:$0xff] %vm1090, %v1083
        %1101 = vst.msk [vmem:[#allocation3 + $0x50] sm:$0xff] %vm1090, %v1084
        %1102 = vst.msk [vmem:[#allocation3 + $0x58] sm:$0xff] %vm1090, %v1085
        %1103 = vst.msk [vmem:[#allocation3 + $0x60] sm:$0xff] %vm1090, %v1086
        %1104 = vst.msk [vmem:[#allocation3 + $0x68] sm:$0xff] %vm1090, %v1087
        %1105 = vst.msk [vmem:[#allocation3 + $0x70] sm:$0xff] %vm1090, %v1088
        %1106 = vst.msk [vmem:[#allocation3 + $0x78] sm:$0xff] %vm1090, %v1089
        %v1107 = vld [vmem:[#allocation4] sm:$0xff]
        %v1108 = vld [vmem:[#allocation4 + $0x8] sm:$0xff]
        %v1109 = vld [vmem:[#allocation4 + $0x10] sm:$0xff]
        %v1110 = vld [vmem:[#allocation4 + $0x18] sm:$0xff]
        %v1111 = vld [vmem:[#allocation4 + $0x20] sm:$0xff]
        %v1112 = vld [vmem:[#allocation4 + $0x28] sm:$0xff]
        %v1113 = vld [vmem:[#allocation4 + $0x30] sm:$0xff]
        %v1114 = vld [vmem:[#allocation4 + $0x38] sm:$0xff]
        %v1115 = vld [vmem:[#allocation4 + $0x40] sm:$0xff]
        %v1116 = vld [vmem:[#allocation4 + $0x48] sm:$0xff]
        %v1117 = vld [vmem:[#allocation4 + $0x50] sm:$0xff]
        %v1118 = vld [vmem:[#allocation4 + $0x58] sm:$0xff]
        %v1119 = vld [vmem:[#allocation4 + $0x60] sm:$0xff]
        %v1120 = vld [vmem:[#allocation4 + $0x68] sm:$0xff]
        %v1121 = vld [vmem:[#allocation4 + $0x70] sm:$0xff]
        %v1122 = vld [vmem:[#allocation4 + $0x78] sm:$0xff]
        %1124 = vset.pattern.permute.xlu0 0
        %1125 = vperm.xlu0 %1124, %v851
        %v1126 = vpop.permute.xlu0 %1125
        %1129 = vset.pattern.permute.xlu0 0
        %1130 = vperm.xlu0 %1129, %v853
        %v1131 = vpop.permute.xlu0 %1130
        %1134 = vset.pattern.permute.xlu0 0
        %1135 = vperm.xlu0 %1134, %v855
        %v1136 = vpop.permute.xlu0 %1135
        %1139 = vset.pattern.permute.xlu0 0
        %1140 = vperm.xlu0 %1139, %v857
        %v1141 = vpop.permute.xlu0 %1140
        %1144 = vset.pattern.permute.xlu0 0
        %1145 = vperm.xlu0 %1144, %v859
        %v1146 = vpop.permute.xlu0 %1145
        %1149 = vset.pattern.permute.xlu0 0
        %1150 = vperm.xlu0 %1149, %v861
        %v1151 = vpop.permute.xlu0 %1150
        %1154 = vset.pattern.permute.xlu0 0
        %1155 = vperm.xlu0 %1154, %v863
        %v1156 = vpop.permute.xlu0 %1155
        %1159 = vset.pattern.permute.xlu0 0
        %1160 = vperm.xlu0 %1159, %v865
        %v1161 = vpop.permute.xlu0 %1160
        %1164 = vset.pattern.permute.xlu0 0
        %1165 = vperm.xlu0 %1164, %v867
        %v1166 = vpop.permute.xlu0 %1165
        %1169 = vset.pattern.permute.xlu0 0
        %1170 = vperm.xlu0 %1169, %v869
        %v1171 = vpop.permute.xlu0 %1170
        %1174 = vset.pattern.permute.xlu0 0
        %1175 = vperm.xlu0 %1174, %v871
        %v1176 = vpop.permute.xlu0 %1175
        %1179 = vset.pattern.permute.xlu0 0
        %1180 = vperm.xlu0 %1179, %v873
        %v1181 = vpop.permute.xlu0 %1180
        %1184 = vset.pattern.permute.xlu0 0
        %1185 = vperm.xlu0 %1184, %v875
        %v1186 = vpop.permute.xlu0 %1185
        %1189 = vset.pattern.permute.xlu0 0
        %1190 = vperm.xlu0 %1189, %v877
        %v1191 = vpop.permute.xlu0 %1190
        %1194 = vset.pattern.permute.xlu0 0
        %1195 = vperm.xlu0 %1194, %v879
        %v1196 = vpop.permute.xlu0 %1195
        %1199 = vset.pattern.permute.xlu0 0
        %1200 = vperm.xlu0 %1199, %v881
        %v1201 = vpop.permute.xlu0 %1200
        %v1203 = vmul.f32 %v1126, %v1107
        %v1204 = vmul.f32 %v1131, %v1108
        %v1205 = vmul.f32 %v1136, %v1109
        %v1206 = vmul.f32 %v1141, %v1110
        %v1207 = vmul.f32 %v1146, %v1111
        %v1208 = vmul.f32 %v1151, %v1112
        %v1209 = vmul.f32 %v1156, %v1113
        %v1210 = vmul.f32 %v1161, %v1114
        %v1211 = vmul.f32 %v1166, %v1115
        %v1212 = vmul.f32 %v1171, %v1116
        %v1213 = vmul.f32 %v1176, %v1117
        %v1214 = vmul.f32 %v1181, %v1118
        %v1215 = vmul.f32 %v1186, %v1119
        %v1216 = vmul.f32 %v1191, %v1120
        %v1217 = vmul.f32 %v1196, %v1121
        %v1218 = vmul.f32 %v1201, %v1122
        %v1219 = vpack.c.bf16 %v981, %v979
        %v1220 = vpack.c.bf16 %v985, %v983
        %v1221 = vpack.c.bf16 %v989, %v987
        %v1222 = vpack.c.bf16 %v993, %v991
        %v1223 = vpack.c.bf16 %v997, %v995
        %v1224 = vpack.c.bf16 %v1001, %v999
        %v1225 = vpack.c.bf16 %v1005, %v1003
        %v1226 = vpack.c.bf16 %v1009, %v1007
        %v1243 = vunpack.c.l.b16 %v481
        %v1244 = vunpack.c.l.b16 %v482
        %v1245 = vunpack.c.l.b16 %v483
        %v1246 = vunpack.c.l.b16 %v484
        %v1247 = vunpack.c.l.b16 %v485
        %v1248 = vunpack.c.l.b16 %v486
        %v1249 = vunpack.c.l.b16 %v487
        %v1250 = vunpack.c.l.b16 %v488
        %v1251 = vunpack.c.l.b16 %v489
        %v1252 = vunpack.c.l.b16 %v490
        %v1253 = vunpack.c.l.b16 %v491
        %v1254 = vunpack.c.l.b16 %v492
        %v1255 = vunpack.c.l.b16 %v493
        %v1256 = vunpack.c.l.b16 %v494
        %v1257 = vunpack.c.l.b16 %v495
        %v1258 = vunpack.c.l.b16 %v496
        %v1259 = vpack.c.b16 %v1244, %v1243
        %v1260 = vpack.c.b16 %v1246, %v1245
        %v1261 = vpack.c.b16 %v1248, %v1247
        %v1262 = vpack.c.b16 %v1250, %v1249
        %v1263 = vpack.c.b16 %v1252, %v1251
        %v1264 = vpack.c.b16 %v1254, %v1253
        %v1265 = vpack.c.b16 %v1256, %v1255
        %v1266 = vpack.c.b16 %v1258, %v1257
        %1275 = vmatprep.subr.bf16.mxu0 0
        %1276 = vmatpush1.bf16.msra.mxu0 %v1259
        %1277 = vmatprep.subr.bf16.mxu0 0
        %1278 = vmatpush1.bf16.msra.mxu0 %v1260
        %1279 = vmatprep.subr.bf16.mxu0 0
        %1280 = vmatpush1.bf16.msra.mxu0 %v1261
        %1281 = vmatprep.subr.bf16.mxu0 0
        %1282 = vmatpush1.bf16.msra.mxu0 %v1262
        %1283 = vmatprep.subr.bf16.mxu0 0
        %1284 = vmatpush1.bf16.msra.mxu0 %v1263
        %1285 = vmatprep.subr.bf16.mxu0 0
        %1286 = vmatpush1.bf16.msra.mxu0 %v1264
        %1287 = vmatprep.subr.bf16.mxu0 0
        %1288 = vmatpush1.bf16.msra.mxu0 %v1265
        %1289 = vmatprep.subr.bf16.mxu0 0
        %1290 = vmatpush1.bf16.msra.mxu0 %v1266
        %1291 = vmatprep.subr.bf16.mxu0 0
        %1292 = vmatpush1.bf16.msra.mxu0 0
        %1293 = vmatprep.subr.bf16.mxu0 0
        %1294 = vmatpush1.bf16.msra.mxu0 0
        %1295 = vmatprep.subr.bf16.mxu0 0
        %1296 = vmatpush1.bf16.msra.mxu0 0
        %1297 = vmatprep.subr.bf16.mxu0 0
        %1298 = vmatpush1.bf16.msra.mxu0 0
        %1299 = vmatprep.subr.bf16.mxu0 0
        %1300 = vmatpush1.bf16.msra.mxu0 0
        %1301 = vmatprep.subr.bf16.mxu0 0
        %1302 = vmatpush1.bf16.msra.mxu0 0
        %1303 = vmatprep.subr.bf16.mxu0 0
        %1304 = vmatpush1.bf16.msra.mxu0 0
        %1305 = vmatprep.subr.bf16.mxu0 0
        %1306 = vmatpush1.bf16.msra.mxu0 0
        %1307 = vmatprep.mubr.bf16.mxu0 0
        %1308 = vmatmul.mubr.bf16.gmra.mrb[0].mxu0 %v1219
        %v1309 = vpop.f32.mrb[0].mxu0
        %v1310 = vadd.f32 0.0, %v1309
        %v1311 = vpop.f32.mrb[0].mxu0
        %v1312 = vpop.f32.mrb[0].mxu0
        %v1313 = vadd.f32 0.0, %v1312
        %v1314 = vpop.f32.mrb[0].mxu0
        %1315 = vmatprep.mubr.bf16.mxu0 0
        %1316 = vmatmul.mubr.bf16.gmra.mrb[0].mxu0 %v1220
        %v1317 = vpop.f32.mrb[0].mxu0
        %v1318 = vadd.f32 0.0, %v1317
        %v1319 = vpop.f32.mrb[0].mxu0
        %v1320 = vpop.f32.mrb[0].mxu0
        %v1321 = vadd.f32 0.0, %v1320
        %v1322 = vpop.f32.mrb[0].mxu0
        %1323 = vmatprep.mubr.bf16.mxu0 0
        %1324 = vmatmul.mubr.bf16.gmra.mrb[0].mxu0 %v1221
        %v1325 = vpop.f32.mrb[0].mxu0
        %v1326 = vadd.f32 0.0, %v1325
        %v1327 = vpop.f32.mrb[0].mxu0
        %v1328 = vpop.f32.mrb[0].mxu0
        %v1329 = vadd.f32 0.0, %v1328
        %v1330 = vpop.f32.mrb[0].mxu0
        %1331 = vmatprep.mubr.bf16.mxu0 0
        %1332 = vmatmul.mubr.bf16.gmra.mrb[0].mxu0 %v1222
        %v1333 = vpop.f32.mrb[0].mxu0
        %v1334 = vadd.f32 0.0, %v1333
        %v1335 = vpop.f32.mrb[0].mxu0
        %v1336 = vpop.f32.mrb[0].mxu0
        %v1337 = vadd.f32 0.0, %v1336
        %v1338 = vpop.f32.mrb[0].mxu0
        %1339 = vmatprep.mubr.bf16.mxu0 0
        %1340 = vmatmul.mubr.bf16.gmra.mrb[0].mxu0 %v1223
        %v1341 = vpop.f32.mrb[0].mxu0
        %v1342 = vadd.f32 0.0, %v1341
        %v1343 = vpop.f32.mrb[0].mxu0
        %v1344 = vpop.f32.mrb[0].mxu0
        %v1345 = vadd.f32 0.0, %v1344
        %v1346 = vpop.f32.mrb[0].mxu0
        %1347 = vmatprep.mubr.bf16.mxu0 0
        %1348 = vmatmul.mubr.bf16.gmra.mrb[0].mxu0 %v1224
        %v1349 = vpop.f32.mrb[0].mxu0
        %v1350 = vadd.f32 0.0, %v1349
        %v1351 = vpop.f32.mrb[0].mxu0
        %v1352 = vpop.f32.mrb[0].mxu0
        %v1353 = vadd.f32 0.0, %v1352
        %v1354 = vpop.f32.mrb[0].mxu0
        %1355 = vmatprep.mubr.bf16.mxu0 0
        %1356 = vmatmul.mubr.bf16.gmra.mrb[0].mxu0 %v1225
        %v1357 = vpop.f32.mrb[0].mxu0
        %v1358 = vadd.f32 0.0, %v1357
        %v1359 = vpop.f32.mrb[0].mxu0
        %v1360 = vpop.f32.mrb[0].mxu0
        %v1361 = vadd.f32 0.0, %v1360
        %v1362 = vpop.f32.mrb[0].mxu0
        %1363 = vmatprep.mubr.bf16.mxu0 0
        %1364 = vmatmul.mubr.bf16.gmra.mrb[0].mxu0 %v1226
        %v1365 = vpop.f32.mrb[0].mxu0
        %v1366 = vadd.f32 0.0, %v1365
        %v1367 = vpop.f32.mrb[0].mxu0
        %v1368 = vpop.f32.mrb[0].mxu0
        %v1369 = vadd.f32 0.0, %v1368
        %v1370 = vpop.f32.mrb[0].mxu0
        %1371 = vdwg.mxu0
        %v1372 = vadd.f32 %v1203, %v1310
        %v1373 = vadd.f32 %v1204, %v1313
        %v1374 = vadd.f32 %v1205, %v1318
        %v1375 = vadd.f32 %v1206, %v1321
        %v1376 = vadd.f32 %v1207, %v1326
        %v1377 = vadd.f32 %v1208, %v1329
        %v1378 = vadd.f32 %v1209, %v1334
        %v1379 = vadd.f32 %v1210, %v1337
        %v1380 = vadd.f32 %v1211, %v1342
        %v1381 = vadd.f32 %v1212, %v1345
        %v1382 = vadd.f32 %v1213, %v1350
        %v1383 = vadd.f32 %v1214, %v1353
        %v1384 = vadd.f32 %v1215, %v1358
        %v1385 = vadd.f32 %v1216, %v1361
        %v1386 = vadd.f32 %v1217, %v1366
        %v1387 = vadd.f32 %v1218, %v1369
        %1388 = vst [vmem:[#allocation4] sm:$0xff] %v1372
        %1389 = vst [vmem:[#allocation4 + $0x8] sm:$0xff] %v1373
        %1390 = vst [vmem:[#allocation4 + $0x10] sm:$0xff] %v1374
        %1391 = vst [vmem:[#allocation4 + $0x18] sm:$0xff] %v1375
        %1392 = vst [vmem:[#allocation4 + $0x20] sm:$0xff] %v1376
        %1393 = vst [vmem:[#allocation4 + $0x28] sm:$0xff] %v1377
        %1394 = vst [vmem:[#allocation4 + $0x30] sm:$0xff] %v1378
        %1395 = vst [vmem:[#allocation4 + $0x38] sm:$0xff] %v1379
        %1396 = vst [vmem:[#allocation4 + $0x40] sm:$0xff] %v1380
        %1397 = vst [vmem:[#allocation4 + $0x48] sm:$0xff] %v1381
        %1398 = vst [vmem:[#allocation4 + $0x50] sm:$0xff] %v1382
        %1399 = vst [vmem:[#allocation4 + $0x58] sm:$0xff] %v1383
        %1400 = vst [vmem:[#allocation4 + $0x60] sm:$0xff] %v1384
        %1401 = vst [vmem:[#allocation4 + $0x68] sm:$0xff] %v1385
        %1402 = vst [vmem:[#allocation4 + $0x70] sm:$0xff] %v1386
        %1403 = vst [vmem:[#allocation4 + $0x78] sm:$0xff] %v1387
        %1404 = vst.msk [vmem:[#allocation2] sm:$0xff] %vm1090, %v786
        %1405 = vst.msk [vmem:[#allocation2 + $0x8] sm:$0xff] %vm1090, %v787
        %1406 = vst.msk [vmem:[#allocation2 + $0x10] sm:$0xff] %vm1090, %v788
        %1407 = vst.msk [vmem:[#allocation2 + $0x18] sm:$0xff] %vm1090, %v789
        %1408 = vst.msk [vmem:[#allocation2 + $0x20] sm:$0xff] %vm1090, %v790
        %1409 = vst.msk [vmem:[#allocation2 + $0x28] sm:$0xff] %vm1090, %v791
        %1410 = vst.msk [vmem:[#allocation2 + $0x30] sm:$0xff] %vm1090, %v792
        %1411 = vst.msk [vmem:[#allocation2 + $0x38] sm:$0xff] %vm1090, %v793
        %1412 = vst.msk [vmem:[#allocation2 + $0x40] sm:$0xff] %vm1090, %v794
        %1413 = vst.msk [vmem:[#allocation2 + $0x48] sm:$0xff] %vm1090, %v795
        %1414 = vst.msk [vmem:[#allocation2 + $0x50] sm:$0xff] %vm1090, %v796
        %1415 = vst.msk [vmem:[#allocation2 + $0x58] sm:$0xff] %vm1090, %v797
        %1416 = vst.msk [vmem:[#allocation2 + $0x60] sm:$0xff] %vm1090, %v798
        %1417 = vst.msk [vmem:[#allocation2 + $0x68] sm:$0xff] %vm1090, %v799
        %1418 = vst.msk [vmem:[#allocation2 + $0x70] sm:$0xff] %vm1090, %v800
        %1419 = vst.msk [vmem:[#allocation2 + $0x78] sm:$0xff] %vm1090, %v801
        // Predicated region
        $region57: #{scaled_dot_product_attention.1} parent=35 // pred_check
          %p1420 = pneg %p380
        $region58: #{scaled_dot_product_attention.1} parent=35 // pred_check_branch
          %1422 = sbr.rel (%p1420) target = $region60
        $region59: #{scaled_dot_product_attention.1} parent=35 // pred_region
          %v1423 = vld [vmem:[#allocation3] sm:$0xff]
          %v1424 = vld [vmem:[#allocation3 + $0x8] sm:$0xff]
          %v1425 = vld [vmem:[#allocation3 + $0x10] sm:$0xff]
          %v1426 = vld [vmem:[#allocation3 + $0x18] sm:$0xff]
          %v1427 = vld [vmem:[#allocation3 + $0x20] sm:$0xff]
          %v1428 = vld [vmem:[#allocation3 + $0x28] sm:$0xff]
          %v1429 = vld [vmem:[#allocation3 + $0x30] sm:$0xff]
          %v1430 = vld [vmem:[#allocation3 + $0x38] sm:$0xff]
          %v1431 = vld [vmem:[#allocation3 + $0x40] sm:$0xff]
          %v1432 = vld [vmem:[#allocation3 + $0x48] sm:$0xff]
          %v1433 = vld [vmem:[#allocation3 + $0x50] sm:$0xff]
          %v1434 = vld [vmem:[#allocation3 + $0x58] sm:$0xff]
          %v1435 = vld [vmem:[#allocation3 + $0x60] sm:$0xff]
          %v1436 = vld [vmem:[#allocation3 + $0x68] sm:$0xff]
          %v1437 = vld [vmem:[#allocation3 + $0x70] sm:$0xff]
          %v1438 = vld [vmem:[#allocation3 + $0x78] sm:$0xff]
          %v1439 = vrcp.pop %v1423
          %v1440 = vrcp.pop %v1424
          %v1441 = vrcp.pop %v1425
          %v1442 = vrcp.pop %v1426
          %v1443 = vrcp.pop %v1427
          %v1444 = vrcp.pop %v1428
          %v1445 = vrcp.pop %v1429
          %v1446 = vrcp.pop %v1430
          %v1447 = vrcp.pop %v1431
          %v1448 = vrcp.pop %v1432
          %v1449 = vrcp.pop %v1433
          %v1450 = vrcp.pop %v1434
          %v1451 = vrcp.pop %v1435
          %v1452 = vrcp.pop %v1436
          %v1453 = vrcp.pop %v1437
          %v1454 = vrcp.pop %v1438
          %v1455 = vld [vmem:[#allocation4] sm:$0xff]
          %v1456 = vld [vmem:[#allocation4 + $0x8] sm:$0xff]
          %v1457 = vld [vmem:[#allocation4 + $0x10] sm:$0xff]
          %v1458 = vld [vmem:[#allocation4 + $0x18] sm:$0xff]
          %v1459 = vld [vmem:[#allocation4 + $0x20] sm:$0xff]
          %v1460 = vld [vmem:[#allocation4 + $0x28] sm:$0xff]
          %v1461 = vld [vmem:[#allocation4 + $0x30] sm:$0xff]
          %v1462 = vld [vmem:[#allocation4 + $0x38] sm:$0xff]
          %v1463 = vld [vmem:[#allocation4 + $0x40] sm:$0xff]
          %v1464 = vld [vmem:[#allocation4 + $0x48] sm:$0xff]
          %v1465 = vld [vmem:[#allocation4 + $0x50] sm:$0xff]
          %v1466 = vld [vmem:[#allocation4 + $0x58] sm:$0xff]
          %v1467 = vld [vmem:[#allocation4 + $0x60] sm:$0xff]
          %v1468 = vld [vmem:[#allocation4 + $0x68] sm:$0xff]
          %v1469 = vld [vmem:[#allocation4 + $0x70] sm:$0xff]
          %v1470 = vld [vmem:[#allocation4 + $0x78] sm:$0xff]
          %1472 = vset.pattern.permute.xlu0 0
          %1473 = vperm.xlu0 %1472, %v1439
          %v1474 = vpop.permute.xlu0 %1473
          %1477 = vset.pattern.permute.xlu0 0
          %1478 = vperm.xlu0 %1477, %v1440
          %v1479 = vpop.permute.xlu0 %1478
          %1482 = vset.pattern.permute.xlu0 0
          %1483 = vperm.xlu0 %1482, %v1441
          %v1484 = vpop.permute.xlu0 %1483
          %1487 = vset.pattern.permute.xlu0 0
          %1488 = vperm.xlu0 %1487, %v1442
          %v1489 = vpop.permute.xlu0 %1488
          %1492 = vset.pattern.permute.xlu0 0
          %1493 = vperm.xlu0 %1492, %v1443
          %v1494 = vpop.permute.xlu0 %1493
          %1497 = vset.pattern.permute.xlu0 0
          %1498 = vperm.xlu0 %1497, %v1444
          %v1499 = vpop.permute.xlu0 %1498
          %1502 = vset.pattern.permute.xlu0 0
          %1503 = vperm.xlu0 %1502, %v1445
          %v1504 = vpop.permute.xlu0 %1503
          %1507 = vset.pattern.permute.xlu0 0
          %1508 = vperm.xlu0 %1507, %v1446
          %v1509 = vpop.permute.xlu0 %1508
          %1512 = vset.pattern.permute.xlu0 0
          %1513 = vperm.xlu0 %1512, %v1447
          %v1514 = vpop.permute.xlu0 %1513
          %1517 = vset.pattern.permute.xlu0 0
          %1518 = vperm.xlu0 %1517, %v1448
          %v1519 = vpop.permute.xlu0 %1518
          %1522 = vset.pattern.permute.xlu0 0
          %1523 = vperm.xlu0 %1522, %v1449
          %v1524 = vpop.permute.xlu0 %1523
          %1527 = vset.pattern.permute.xlu0 0
          %1528 = vperm.xlu0 %1527, %v1450
          %v1529 = vpop.permute.xlu0 %1528
          %1532 = vset.pattern.permute.xlu0 0
          %1533 = vperm.xlu0 %1532, %v1451
          %v1534 = vpop.permute.xlu0 %1533
          %1537 = vset.pattern.permute.xlu0 0
          %1538 = vperm.xlu0 %1537, %v1452
          %v1539 = vpop.permute.xlu0 %1538
          %1542 = vset.pattern.permute.xlu0 0
          %1543 = vperm.xlu0 %1542, %v1453
          %v1544 = vpop.permute.xlu0 %1543
          %1547 = vset.pattern.permute.xlu0 0
          %1548 = vperm.xlu0 %1547, %v1454
          %v1549 = vpop.permute.xlu0 %1548
          %v1551 = vmul.f32 %v1455, %v1474
          %v1552 = vmul.f32 %v1456, %v1479
          %v1553 = vmul.f32 %v1457, %v1484
          %v1554 = vmul.f32 %v1458, %v1489
          %v1555 = vmul.f32 %v1459, %v1494
          %v1556 = vmul.f32 %v1460, %v1499
          %v1557 = vmul.f32 %v1461, %v1504
          %v1558 = vmul.f32 %v1462, %v1509
          %v1559 = vmul.f32 %v1463, %v1514
          %v1560 = vmul.f32 %v1464, %v1519
          %v1561 = vmul.f32 %v1465, %v1524
          %v1562 = vmul.f32 %v1466, %v1529
          %v1563 = vmul.f32 %v1467, %v1534
          %v1564 = vmul.f32 %v1468, %v1539
          %v1565 = vmul.f32 %v1469, %v1544
          %v1566 = vmul.f32 %v1470, %v1549
          %v1567 = vpack.c.bf16 %v1552, %v1551
          %v1568 = vpack.c.bf16 %v1554, %v1553
          %v1569 = vpack.c.bf16 %v1556, %v1555
          %v1570 = vpack.c.bf16 %v1558, %v1557
          %v1571 = vpack.c.bf16 %v1560, %v1559
          %v1572 = vpack.c.bf16 %v1562, %v1561
          %v1573 = vpack.c.bf16 %v1564, %v1563
          %v1574 = vpack.c.bf16 %v1566, %v1565
          %v1583 = vunpack.c.l.b16 %v1567
          %v1584 = vunpack.c.h.b16 %v1567
          %v1585 = vunpack.c.l.b16 %v1568
          %v1586 = vunpack.c.h.b16 %v1568
          %v1587 = vunpack.c.l.b16 %v1569
          %v1588 = vunpack.c.h.b16 %v1569
          %v1589 = vunpack.c.l.b16 %v1570
          %v1590 = vunpack.c.h.b16 %v1570
          %v1591 = vunpack.c.l.b16 %v1571
          %v1592 = vunpack.c.h.b16 %v1571
          %v1593 = vunpack.c.l.b16 %v1572
          %v1594 = vunpack.c.h.b16 %v1572
          %v1595 = vunpack.c.l.b16 %v1573
          %v1596 = vunpack.c.h.b16 %v1573
          %v1597 = vunpack.c.l.b16 %v1574
          %v1598 = vunpack.c.h.b16 %v1574
          %v1599 = vpack.c.b16 %v1583, %v1583
          %v1600 = vpack.c.b16 %v1584, %v1584
          %v1601 = vpack.c.b16 %v1585, %v1585
          %v1602 = vpack.c.b16 %v1586, %v1586
          %v1603 = vpack.c.b16 %v1587, %v1587
          %v1604 = vpack.c.b16 %v1588, %v1588
          %v1605 = vpack.c.b16 %v1589, %v1589
          %v1606 = vpack.c.b16 %v1590, %v1590
          %v1607 = vpack.c.b16 %v1591, %v1591
          %v1608 = vpack.c.b16 %v1592, %v1592
          %v1609 = vpack.c.b16 %v1593, %v1593
          %v1610 = vpack.c.b16 %v1594, %v1594
          %v1611 = vpack.c.b16 %v1595, %v1595
          %v1612 = vpack.c.b16 %v1596, %v1596
          %v1613 = vpack.c.b16 %v1597, %v1597
          %v1614 = vpack.c.b16 %v1598, %v1598
          %1631 = vst [vmem:[%s372] sm:$0xf] %v1599
          %1632 = vst [vmem:[%s372 + $0x4] sm:$0xf] %v1600
          %1633 = vst [vmem:[%s372 + $0x8] sm:$0xf] %v1601
          %1634 = vst [vmem:[%s372 + $0xc] sm:$0xf] %v1602
          %1635 = vst [vmem:[%s372 + $0x10] sm:$0xf] %v1603
          %1636 = vst [vmem:[%s372 + $0x14] sm:$0xf] %v1604
          %1637 = vst [vmem:[%s372 + $0x18] sm:$0xf] %v1605
          %1638 = vst [vmem:[%s372 + $0x1c] sm:$0xf] %v1606
          %1639 = vst [vmem:[%s372 + $0x20] sm:$0xf] %v1607
          %1640 = vst [vmem:[%s372 + $0x24] sm:$0xf] %v1608
          %1641 = vst [vmem:[%s372 + $0x28] sm:$0xf] %v1609
          %1642 = vst [vmem:[%s372 + $0x2c] sm:$0xf] %v1610
          %1643 = vst [vmem:[%s372 + $0x30] sm:$0xf] %v1611
          %1644 = vst [vmem:[%s372 + $0x34] sm:$0xf] %v1612
          %1645 = vst [vmem:[%s372 + $0x38] sm:$0xf] %v1613
          %1646 = vst [vmem:[%s372 + $0x3c] sm:$0xf] %v1614
        $region60: #{scaled_dot_product_attention.1} parent=35 // pred_fallthru
          _
        %s1647 = sand.u32 %s170, 1
        %s1648 = scalar_lea.sflag [#allocation7], %s1647
        %s1649 = sand.u32 %s170, 1
        %s1650 = smul.addr %s1649, 64
        %s1651 = scalar_lea.vmem [#allocation13], %s1650
        // Predicated region
        $region61: #{scaled_dot_product_attention.1} parent=35 // pred_check
          %p1652 = pneg %p180
        $region62: #{scaled_dot_product_attention.1} parent=35 // pred_check_branch
          %1654 = sbr.rel (%p1652) target = $region64
        $region63: #{scaled_dot_product_attention.1} parent=35 // pred_region
          %s1655 = smul.u32 16, %s33
          %s1657 = ssub.s32 1024, 1024
          %1658 = vsyncadd %s1648, %s1657
          %s1659 = smul.addr %s32, 16
          %s1660 = sadd.s32 %s1655, %s1659
          %s1661 = smul.addr %s1660, 64
          %s1662 = scalar_lea.hbm %s4, %s1661
          %s1663 = sshll.u32 %s1651, 4
          %s1664 = int_to_ptr.vmem [resolvable:$true] %s1663
          %1669 = dma.vmem_to_hbm [thread:$0]  %s1664, 1024, %s1662, %s1648, 64, 64, 4
        $region64: #{scaled_dot_product_attention.1} parent=35 // pred_fallthru
          _
      $region36: #{scaled_dot_product_attention.1} parent=5 // pred_fallthru
        _
      %p1670 = scmp.le.s32.totalorder 2, %s22
      // Predicated region
      $region65: #{scaled_dot_product_attention.1} parent=5 // pred_check
        %p1671 = pneg %p1670
      $region66: #{scaled_dot_product_attention.1} parent=5 // pred_check_branch
        %1673 = sbr.rel (%p1671) target = $region68
      $region67: #{scaled_dot_product_attention.1} parent=5 // pred_region
        %s1674 = ssub.s32 %s22, 2
        // Predicated region
        $region69: #{scaled_dot_product_attention.1} parent=67 // pred_check
          %p1675 = pneg %p186
        $region70: #{scaled_dot_product_attention.1} parent=67 // pred_check_branch
          %1677 = sbr.rel (%p1675) target = $region72
        $region71: #{scaled_dot_product_attention.1} parent=67 // pred_region
          %s1678 = sand.u32 %s171, 1
          %s1679 = scalar_lea.sflag [#allocation7], %s1678
          %s1680 = sand.u32 %s171, 1
          %s1681 = smul.addr %s1680, 64
          %s1682 = scalar_lea.vmem [#allocation13], %s1681
          %1683 = dma.done %s1679, 1024
        $region72: #{scaled_dot_product_attention.1} parent=67 // pred_fallthru
          _
      $region68: #{scaled_dot_product_attention.1} parent=5 // pred_fallthru
        _
    $region6: #{scaled_dot_product_attention.1} parent=1 // loop_footer
      %s26 = sadd.s32 1, %s22
    $region7: #{scaled_dot_product_attention.1} parent=1 // loop_footer_branch
      %21 = sbr.rel target = $region3
    $region8: #{scaled_dot_product_attention.1} parent=1 // loop_exit
      _
    %1684 = vsyncpa [#allocation6], 1
    %s1685 = scalar_lea.sflag [#allocation6], 1
    %1686 = vsyncpa %s1685, 1
    %1687 = vsyncpa [#allocation9], 1
    %s1688 = scalar_lea.sflag [#allocation9], 1
    %1689 = vsyncpa %s1688, 1
    %1690 = vsyncpa [#allocation12], 1
    %s1691 = scalar_lea.sflag [#allocation12], 1
    %1692 = vsyncpa %s1691, 1
    %1693 = vsyncpa [#allocation7], 1
    %s1694 = scalar_lea.sflag [#allocation7], 1
    %1695 = vsyncpa %s1694, 1

</llo_original>
